<compile_context>
chip_gen: v5e
topology: v5e:2x2
jax: 0.10.0
libtpu: 0.0.40
codegen_flags: <defaults>
</compile_context>

<pallas_src>
import functools

import jax
import jax.numpy as jnp
from jax import lax
from jax.experimental import pallas as pl
from jax.experimental.pallas import tpu as pltpu

EPS = 1e-5          # BatchNorm2d default eps
N_CORE_SPLIT = 2    # leading "parallel" grid axis (2 TCs on v7x; harmless on 1-TC chips)


def _round_up(x, m):
    return (x + m - 1) // m * m


def _lane_pad(x):
    # v6e/v7x MXUs are 2x256x256 -> pad >=128-wide dims to 256; small dims to 128.
    return _round_up(x, 256) if x >= 128 else _round_up(x, 128)


def _pick_tile_k(ck_p):
    for t in (512, 256, 128):
        if ck_p % t == 0:
            return t
    return ck_p


def aspp_forward(x_nchw, w_oihw, gamma, beta, *, padding, dilation, tile_m=256):
    """Forward of _ASPPModule (depth_sep=False path): atrous conv -> BN(train) -> ReLU.

    x_nchw : (N, Cin, H, W) f32, w_oihw : (Cout, Cin, K, K) f32 (bias=False),
    gamma/beta : (Cout,).  Returns (N, Cout, Hout, Wout) f32 (stride=1).
    """
    N, Cin, H, W = x_nchw.shape
    Cout, _, K, _ = w_oihw.shape
    Hout = H + 2 * padding - dilation * (K - 1)
    Wout = W + 2 * padding - dilation * (K - 1)
    assert Hout > 0 and Wout > 0

    M = N * Hout * Wout          # flattened conv-output rows
    Ck = K * K * Cin             # fused contraction dim (im2col)

    # ------------- wrapper layout glue (NCHW<->NHWC transposes are extra HBM
    # passes in XLA; keep NHWC end-to-end in the surrounding model if possible).
    x_nhwc = jnp.transpose(x_nchw, (0, 2, 3, 1)).astype(jnp.bfloat16)
    x_sp = jnp.pad(x_nhwc, ((0, 0), (padding, padding), (padding, padding), (0, 0)))
    taps = []
    for kh in range(K):
        for kw in range(K):
            taps.append(lax.slice(
                x_sp,
                (0, kh * dilation, kw * dilation, 0),
                (N, kh * dilation + Hout, kw * dilation + Wout, Cin)))
    # im2col materialized in bf16 (halves the K^2-blown-up HBM traffic vs f32).
    x_cols = jnp.concatenate(taps, axis=-1).reshape(M, Ck)

    # weight -> (K*K*Cin, Cout), matching tap order (kh, kw, cin), bf16 for the MXU.
    w_mat = jnp.transpose(w_oihw, (2, 3, 1, 0)).reshape(Ck, Cout).astype(jnp.bfloat16)

    # ---- padding: lanes to 128/256 multiples, rows to (cores * TILE_M) multiples ----
    Ck_p = _lane_pad(Ck)
    Co_p = _lane_pad(Cout)
    TILE_M = tile_m
    TILE_K = _pick_tile_k(Ck_p)
    NC = N_CORE_SPLIT
    M_p = _round_up(M, NC * TILE_M)
    n_m = M_p // (NC * TILE_M)       # M tiles per core
    n_k = Ck_p // TILE_K

    # NOTE: padding MUST be zeros -- zero rows/lanes contribute nothing to the
    # matmul or to sum/sumsq, and inv_m below uses the true M.
    x_cols = jnp.pad(x_cols, ((0, M_p - M), (0, Ck_p - Ck)))
    w_mat = jnp.pad(w_mat, ((0, Ck_p - Ck), (0, Co_p - Cout)))

    inv_m = 1.0 / float(M)

    # ---------------- pass 1: tiled conv (bf16 MXU) + per-core BN partial stats ----
    def conv_stats_kernel(x_ref, w_ref, y_ref, psum_ref, psq_ref,
                          acc_ref, sum_ref, sq_ref):
        m = pl.program_id(1)
        k = pl.program_id(2)
        n_m_ = pl.num_programs(1)
        n_k_ = pl.num_programs(2)

        @pl.when((m == 0) & (k == 0))
        def _():  # start of this core's sweep: zero its private partial stats
            sum_ref[...] = jnp.zeros_like(sum_ref)
            sq_ref[...] = jnp.zeros_like(sq_ref)

        @pl.when(k == 0)
        def _():
            acc_ref[...] = jnp.zeros_like(acc_ref)

        # bf16 x bf16 -> f32 accumulate on the MXU.
        acc_ref[...] += jnp.dot(x_ref[...], w_ref[...],
                                preferred_element_type=jnp.float32)

        @pl.when(k == n_k_ - 1)
        def _():
            y = acc_ref[...]                              # (TILE_M, Co_p) f32
            y_ref[...] = y.astype(y_ref.dtype)            # bf16 intermediate
            # (8, Co_p) partial sums: VPU adds per tile; the 8->1 cross-sublane
            # reduce is deferred to the wrapper combine.
            yr = y.reshape(-1, 8, y.shape[-1])
            sum_ref[...] += jnp.sum(yr, axis=0)
            sq_ref[...] += jnp.sum(yr * yr, axis=0)

        # Single writeback per core: psum/psq block index is constant over (m, k),
        # so this write at the final step is the only one flushed to HBM.
        @pl.when((m == n_m_ - 1) & (k == n_k_ - 1))
        def _():
            psum_ref[...] = sum_ref[...]
            psq_ref[...] = sq_ref[...]

    cost1 = pl.CostEstimate(
        flops=2 * M_p * Ck_p * Co_p,
        transcendentals=0,
        bytes_accessed=2 * M_p * Ck_p + 2 * Ck_p * Co_p * NC * n_m + 2 * M_p * Co_p)

    vmem1 = (2 * TILE_M * TILE_K * 2      # x tile (bf16), double-buffered
             + 2 * TILE_K * Co_p * 2      # w tile (bf16), double-buffered
             + 2 * TILE_M * Co_p * 2      # y out tile (bf16), double-buffered
             + 2 * 2 * 8 * Co_p * 4       # psum / psq out blocks
             + TILE_M * Co_p * 4          # f32 accumulator scratch
             + 2 * 8 * Co_p * 4)          # sum / sumsq scratch
    vmem1 = min(int(vmem1 * 1.5) + (2 << 20), 64 << 20)

    y_conv, psum, psq = pl.pallas_call(
        conv_stats_kernel,
        out_shape=(
            jax.ShapeDtypeStruct((M_p, Co_p), jnp.bfloat16),     # pre-BN conv output
            jax.ShapeDtypeStruct((NC * 8, Co_p), jnp.float32),   # per-core partial sum
            jax.ShapeDtypeStruct((NC * 8, Co_p), jnp.float32),   # per-core partial sumsq
        ),
        grid=(NC, n_m, n_k),
        in_specs=[
            pl.BlockSpec((TILE_M, TILE_K), lambda c, m, k: (c * n_m + m, k)),
            pl.BlockSpec((TILE_K, Co_p), lambda c, m, k: (k, 0)),
        ],
        out_specs=(
            pl.BlockSpec((TILE_M, Co_p), lambda c, m, k: (c * n_m + m, 0)),
            pl.BlockSpec((8, Co_p), lambda c, m, k: (c, 0)),
            pl.BlockSpec((8, Co_p), lambda c, m, k: (c, 0)),
        ),
        scratch_shapes=[
            pltpu.VMEM((TILE_M, Co_p), jnp.float32),   # conv accumulator
            pltpu.VMEM((8, Co_p), jnp.float32),        # partial sum
            pltpu.VMEM((8, Co_p), jnp.float32),        # partial sum of squares
        ],
        compiler_params=pltpu.CompilerParams(
            dimension_semantics=("parallel", "arbitrary", "arbitrary"),
            vmem_limit_bytes=vmem1),
        cost_estimate=cost1,
    )(x_cols, w_mat)

    # -------- tiny (Cout,)-sized BN finalize in plain JAX: combine per-core
    # partial sums, then mean/var/rsqrt.  Negligible next to the conv pass.
    total_sum = jnp.sum(psum, axis=0)                       # (Co_p,)
    total_sq = jnp.sum(psq, axis=0)
    mean = total_sum * inv_m
    var = jnp.maximum(total_sq * inv_m - mean * mean, 0.0)  # guard E[y^2]-mean^2
    gamma_p = jnp.pad(gamma.astype(jnp.float32), (0, Co_p - Cout))
    beta_p = jnp.pad(beta.astype(jnp.float32), (0, Co_p - Cout))
    scale = gamma_p * lax.rsqrt(var + EPS)
    shift = beta_p - mean * scale
    scale = scale.reshape(1, Co_p)
    shift = shift.reshape(1, Co_p)

    # ---------------- pass 2: normalize + ReLU (memory-bound; bf16 y halves traffic) ----
    TILE_M2 = NC * TILE_M
    while TILE_M2 < 2048 and M_p % (TILE_M2 * 2) == 0:
        TILE_M2 *= 2
    n_m2 = M_p // TILE_M2

    def bn_relu_kernel(scale_ref, shift_ref, y_ref, o_ref):
        y = y_ref[...].astype(jnp.float32)
        o_ref[...] = jnp.maximum(y * scale_ref[...] + shift_ref[...], 0.0)

    cost2 = pl.CostEstimate(
        flops=2 * M_p * Co_p,
        transcendentals=0,
        bytes_accessed=2 * M_p * Co_p + 4 * M_p * Co_p)

    vmem2 = (2 * TILE_M2 * Co_p * 2       # y tile (bf16) in, double-buffered
             + 2 * TILE_M2 * Co_p * 4     # f32 out, double-buffered
             + 2 * 2 * Co_p * 4)          # scale / shift
    vmem2 = min(int(vmem2 * 1.5) + (2 << 20), 64 << 20)

    out_flat = pl.pallas_call(
        bn_relu_kernel,
        out_shape=jax.ShapeDtypeStruct((M_p, Co_p), jnp.float32),
        grid=(n_m2,),
        in_specs=[
            pl.BlockSpec((1, Co_p), lambda i: (0, 0)),
            pl.BlockSpec((1, Co_p), lambda i: (0, 0)),
            pl.BlockSpec((TILE_M2, Co_p), lambda i: (i, 0)),
        ],
        out_specs=pl.BlockSpec((TILE_M2, Co_p), lambda i: (i, 0)),
        compiler_params=pltpu.CompilerParams(
            dimension_semantics=("parallel",),   # both v7x TCs can take tiles
            vmem_limit_bytes=vmem2),
        cost_estimate=cost2,
    )(scale, shift, y_conv)

    # wrapper layout glue back to NCHW (extra HBM pass -- see perf note above).
    out = out_flat[:M, :Cout].reshape(N, Hout, Wout, Cout).transpose(0, 3, 1, 2)
    return out


def aspp_reference(x_nchw, w_oihw, gamma, beta, *, padding, dilation):
    """Pure-JAX f32 reference matching PyTorch semantics (training-mode BN)."""
    y = lax.conv_general_dilated(
        x_nchw, w_oihw, window_strides=(1, 1),
        padding=[(padding, padding), (padding, padding)],
        rhs_dilation=(dilation, dilation),
        dimension_numbers=("NCHW", "OIHW", "NCHW"))
    mean = jnp.mean(y, axis=(0, 2, 3), keepdims=True)
    var = jnp.mean((y - mean) ** 2, axis=(0, 2, 3), keepdims=True)
    yn = (y - mean) / jnp.sqrt(var + EPS)
    yn = yn * gamma[None, :, None, None] + beta[None, :, None, None]
    return jnp.maximum(yn, 0.0)


if __name__ == "__main__":
    # _ASPPModule(inplanes=4, planes=8, kernel_size=3, padding=2, dilation=2)
    N, Cin, Cout, H, W = 2, 4, 8, 16, 16
    K, padding, dilation = 3, 2, 2

    key = jax.random.PRNGKey(0)
    k_x, k_w, k_g, k_b = jax.random.split(key, 4)
    x = jax.random.normal(k_x, (N, Cin, H, W), jnp.float32)
    # Conv2d(inplanes, planes, kernel_size, bias=False) weight: (Cout, Cin, K, K)
    w = jax.random.normal(k_w, (Cout, Cin, K, K), jnp.float32) * 0.1
    # BatchNorm2d(planes) affine params (deterministic, non-trivial)
    gamma = 1.0 + 0.1 * jax.random.normal(k_g, (Cout,), jnp.float32)
    beta = 0.1 * jax.random.normal(k_b, (Cout,), jnp.float32)

    fwd = jax.jit(functools.partial(aspp_forward, padding=padding, dilation=dilation))
    out = jax.block_until_ready(fwd(x, w, gamma, beta))

    ref = aspp_reference(x, w, gamma, beta, padding=padding, dilation=dilation)
    assert out.shape == (N, Cout, H, W), out.shape
    # bf16 MXU operands -> ~1e-2-level agreement vs the f32 reference.
    err = float(jnp.max(jnp.abs(out - ref)))
    assert jnp.allclose(out, ref, atol=5e-2, rtol=5e-2), err

    print("KERNEL_OK")
</pallas_src>

<mosaic_0001>
module attributes {stable_mosaic.version = 11 : i64} {
  func.func @conv_stats_kernel(%arg0: i32, %arg1: i32, %arg2: i32, %arg3: memref<256x128xbf16, #tpu.memory_space<vmem>>, %arg4: memref<128x128xbf16, #tpu.memory_space<vmem>>, %arg5: memref<256x128xbf16, #tpu.memory_space<vmem>>, %arg6: memref<8x128xf32, #tpu.memory_space<vmem>>, %arg7: memref<8x128xf32, #tpu.memory_space<vmem>>, %arg8: memref<256x128xf32, #tpu.memory_space<vmem>>, %arg9: memref<8x128xf32, #tpu.memory_space<vmem>>, %arg10: memref<8x128xf32, #tpu.memory_space<vmem>>) attributes {dimension_semantics = [#tpu.dimension_semantics<parallel>, #tpu.dimension_semantics<arbitrary>, #tpu.dimension_semantics<arbitrary>], iteration_bounds = array<i64: 2, 1, 1>, scalar_prefetch = 0 : i64, scratch_operands = 3 : i64, tpu.core_type = #tpu.core_type<tc>, window_params = [{transform_indices = @transform_0, window_bounds = array<i64: 256, 128>}, {transform_indices = @transform_1, window_bounds = array<i64: 128, 128>}, {transform_indices = @transform_2, window_bounds = array<i64: 256, 128>}, {transform_indices = @transform_3, window_bounds = array<i64: 8, 128>}, {transform_indices = @transform_4, window_bounds = array<i64: 8, 128>}]} {
    %c0_i32 = arith.constant 0 : i32
    %0 = arith.cmpi eq, %arg1, %c0_i32 : i32
    %c0_i32_0 = arith.constant 0 : i32
    %1 = arith.cmpi eq, %arg2, %c0_i32_0 : i32
    %2 = arith.andi %0, %1 : i1
    %3 = arith.extui %2 : i1 to i32
    %c0_i32_1 = arith.constant 0 : i32
    %4 = arith.cmpi ne, %3, %c0_i32_1 : i32
    scf.if %4 {
      %cst_16 = arith.constant 0.000000e+00 : f32
      %22 = vector.broadcast %cst_16 : f32 to vector<8x128xf32>
      %c0_17 = arith.constant 0 : index
      %c0_18 = arith.constant 0 : index
      %23 = vector.load %arg9[%c0_17, %c0_18] : memref<8x128xf32, #tpu.memory_space<vmem>>, vector<8x128xf32>
      tpu.vector_store %arg9[%c0_17, %c0_18], %22 {strides = array<i32>} : memref<8x128xf32, #tpu.memory_space<vmem>>, vector<8x128xf32>,
      %cst_19 = arith.constant 0.000000e+00 : f32
      %24 = vector.broadcast %cst_19 : f32 to vector<8x128xf32>
      %c0_20 = arith.constant 0 : index
      %c0_21 = arith.constant 0 : index
      %25 = vector.load %arg10[%c0_20, %c0_21] : memref<8x128xf32, #tpu.memory_space<vmem>>, vector<8x128xf32>
      tpu.vector_store %arg10[%c0_20, %c0_21], %24 {strides = array<i32>} : memref<8x128xf32, #tpu.memory_space<vmem>>, vector<8x128xf32>,
    } else {
    }
    %c0_i32_2 = arith.constant 0 : i32
    %5 = arith.cmpi eq, %arg2, %c0_i32_2 : i32
    %6 = arith.extui %5 : i1 to i32
    %c0_i32_3 = arith.constant 0 : i32
    %7 = arith.cmpi ne, %6, %c0_i32_3 : i32
    scf.if %7 {
      %cst_16 = arith.constant 0.000000e+00 : f32
      %22 = vector.broadcast %cst_16 : f32 to vector<256x128xf32>
      %c0_17 = arith.constant 0 : index
      %c0_18 = arith.constant 0 : index
      %23 = vector.load %arg8[%c0_17, %c0_18] : memref<256x128xf32, #tpu.memory_space<vmem>>, vector<256x128xf32>
      tpu.vector_store %arg8[%c0_17, %c0_18], %22 {strides = array<i32>} : memref<256x128xf32, #tpu.memory_space<vmem>>, vector<256x128xf32>,
    } else {
    }
    %c0 = arith.constant 0 : index
    %c0_4 = arith.constant 0 : index
    %8 = vector.load %arg8[%c0, %c0_4] : memref<256x128xf32, #tpu.memory_space<vmem>>, vector<256x128xf32>
    %c0_5 = arith.constant 0 : index
    %c0_6 = arith.constant 0 : index
    %9 = vector.load %arg3[%c0_5, %c0_6] : memref<256x128xbf16, #tpu.memory_space<vmem>>, vector<256x128xbf16>
    %c0_7 = arith.constant 0 : index
    %c0_8 = arith.constant 0 : index
    %10 = vector.load %arg4[%c0_7, %c0_8] : memref<128x128xbf16, #tpu.memory_space<vmem>>, vector<128x128xbf16>
    %cst = arith.constant dense<0.000000e+00> : vector<256x128xf32>
    %11 = tpu.matmul %9, %10, %cst {dimension_numbers = #tpu.dot_dimension_numbers<[1], [0], [0], [1], [0, 0, 1, 1], [], []>} : vector<256x128xbf16>, vector<128x128xbf16>, vector<256x128xf32> -> vector<256x128xf32>
    %12 = arith.addf %8, %11 : vector<256x128xf32>
    %c0_9 = arith.constant 0 : index
    %c0_10 = arith.constant 0 : index
    %13 = vector.load %arg8[%c0_9, %c0_10] : memref<256x128xf32, #tpu.memory_space<vmem>>, vector<256x128xf32>
    tpu.vector_store %arg8[%c0_9, %c0_10], %12 {strides = array<i32>} : memref<256x128xf32, #tpu.memory_space<vmem>>, vector<256x128xf32>,
    %c0_i32_11 = arith.constant 0 : i32
    %14 = arith.cmpi eq, %arg2, %c0_i32_11 : i32
    %15 = arith.extui %14 : i1 to i32
    %c0_i32_12 = arith.constant 0 : i32
    %16 = arith.cmpi ne, %15, %c0_i32_12 : i32
    scf.if %16 {
      %c0_16 = arith.constant 0 : index
      %c0_17 = arith.constant 0 : index
      %22 = vector.load %arg8[%c0_16, %c0_17] : memref<256x128xf32, #tpu.memory_space<vmem>>, vector<256x128xf32>
      %23 = arith.truncf %22 : vector<256x128xf32> to vector<256x128xbf16>
      %c0_18 = arith.constant 0 : index
      %c0_19 = arith.constant 0 : index
      %24 = vector.load %arg5[%c0_18, %c0_19] : memref<256x128xbf16, #tpu.memory_space<vmem>>, vector<256x128xbf16>
      tpu.vector_store %arg5[%c0_18, %c0_19], %23 {strides = array<i32>} : memref<256x128xbf16, #tpu.memory_space<vmem>>, vector<256x128xbf16>,
      %25 = vector.shape_cast %22 : vector<256x128xf32> to vector<32x8x128xf32>
      %c0_20 = arith.constant 0 : index
      %c0_21 = arith.constant 0 : index
      %26 = vector.load %arg9[%c0_20, %c0_21] : memref<8x128xf32, #tpu.memory_space<vmem>>, vector<8x128xf32>
      %cst_22 = arith.constant dense<0.000000e+00> : vector<8x128xf32>
      %27 = vector.multi_reduction <add>, %25, %cst_22 [0] : vector<32x8x128xf32> to vector<8x128xf32>
      %28 = arith.addf %26, %27 : vector<8x128xf32>
      %c0_23 = arith.constant 0 : index
      %c0_24 = arith.constant 0 : index
      %29 = vector.load %arg9[%c0_23, %c0_24] : memref<8x128xf32, #tpu.memory_space<vmem>>, vector<8x128xf32>
      tpu.vector_store %arg9[%c0_23, %c0_24], %28 {strides = array<i32>} : memref<8x128xf32, #tpu.memory_space<vmem>>, vector<8x128xf32>,
      %c0_25 = arith.constant 0 : index
      %c0_26 = arith.constant 0 : index
      %30 = vector.load %arg10[%c0_25, %c0_26] : memref<8x128xf32, #tpu.memory_space<vmem>>, vector<8x128xf32>
      %31 = arith.mulf %25, %25 : vector<32x8x128xf32>
      %cst_27 = arith.constant dense<0.000000e+00> : vector<8x128xf32>
      %32 = vector.multi_reduction <add>, %31, %cst_27 [0] : vector<32x8x128xf32> to vector<8x128xf32>
      %33 = arith.addf %30, %32 : vector<8x128xf32>
      %c0_28 = arith.constant 0 : index
      %c0_29 = arith.constant 0 : index
      %34 = vector.load %arg10[%c0_28, %c0_29] : memref<8x128xf32, #tpu.memory_space<vmem>>, vector<8x128xf32>
      tpu.vector_store %arg10[%c0_28, %c0_29], %33 {strides = array<i32>} : memref<8x128xf32, #tpu.memory_space<vmem>>, vector<8x128xf32>,
    } else {
    }
    %c0_i32_13 = arith.constant 0 : i32
    %17 = arith.cmpi eq, %arg1, %c0_i32_13 : i32
    %c0_i32_14 = arith.constant 0 : i32
    %18 = arith.cmpi eq, %arg2, %c0_i32_14 : i32
    %19 = arith.andi %17, %18 : i1
    %20 = arith.extui %19 : i1 to i32
    %c0_i32_15 = arith.constant 0 : i32
    %21 = arith.cmpi ne, %20, %c0_i32_15 : i32
    scf.if %21 {
      %c0_16 = arith.constant 0 : index
      %c0_17 = arith.constant 0 : index
      %22 = vector.load %arg9[%c0_16, %c0_17] : memref<8x128xf32, #tpu.memory_space<vmem>>, vector<8x128xf32>
      %c0_18 = arith.constant 0 : index
      %c0_19 = arith.constant 0 : index
      %23 = vector.load %arg6[%c0_18, %c0_19] : memref<8x128xf32, #tpu.memory_space<vmem>>, vector<8x128xf32>
      tpu.vector_store %arg6[%c0_18, %c0_19], %22 {strides = array<i32>} : memref<8x128xf32, #tpu.memory_space<vmem>>, vector<8x128xf32>,
      %c0_20 = arith.constant 0 : index
      %c0_21 = arith.constant 0 : index
      %24 = vector.load %arg10[%c0_20, %c0_21] : memref<8x128xf32, #tpu.memory_space<vmem>>, vector<8x128xf32>
      %c0_22 = arith.constant 0 : index
      %c0_23 = arith.constant 0 : index
      %25 = vector.load %arg7[%c0_22, %c0_23] : memref<8x128xf32, #tpu.memory_space<vmem>>, vector<8x128xf32>
      tpu.vector_store %arg7[%c0_22, %c0_23], %24 {strides = array<i32>} : memref<8x128xf32, #tpu.memory_space<vmem>>, vector<8x128xf32>,
    } else {
    }
    return
  }
  func.func @transform_0(%arg0: i32, %arg1: i32, %arg2: i32) -> (i32, i32) {
    %c1_i32 = arith.constant 1 : i32
    %0 = arith.muli %arg0, %c1_i32 : i32
    %1 = arith.addi %0, %arg1 : i32
    %c0_i32 = arith.constant 0 : i32
    return %1, %arg2 : i32, i32
  }
  func.func @transform_1(%arg0: i32, %arg1: i32, %arg2: i32) -> (i32, i32) {
    %c0_i32 = arith.constant 0 : i32
    %c0_i32_0 = arith.constant 0 : i32
    return %arg2, %c0_i32 : i32, i32
  }
  func.func @transform_2(%arg0: i32, %arg1: i32, %arg2: i32) -> (i32, i32) {
    %c1_i32 = arith.constant 1 : i32
    %0 = arith.muli %arg0, %c1_i32 : i32
    %1 = arith.addi %0, %arg1 : i32
    %c0_i32 = arith.constant 0 : i32
    %c0_i32_0 = arith.constant 0 : i32
    return %1, %c0_i32 : i32, i32
  }
  func.func @transform_3(%arg0: i32, %arg1: i32, %arg2: i32) -> (i32, i32) {
    %c0_i32 = arith.constant 0 : i32
    %c0_i32_0 = arith.constant 0 : i32
    return %arg0, %c0_i32 : i32, i32
  }
  func.func @transform_4(%arg0: i32, %arg1: i32, %arg2: i32) -> (i32, i32) {
    %c0_i32 = arith.constant 0 : i32
    %c0_i32_0 = arith.constant 0 : i32
    return %arg0, %c0_i32 : i32, i32
  }
}

module attributes {stable_mosaic.version = 11 : i64} {
  func.func @bn_relu_kernel(%arg0: i32, %arg1: memref<1x128xf32, #tpu.memory_space<vmem>>, %arg2: memref<1x128xf32, #tpu.memory_space<vmem>>, %arg3: memref<512x128xbf16, #tpu.memory_space<vmem>>, %arg4: memref<512x128xf32, #tpu.memory_space<vmem>>) attributes {dimension_semantics = [#tpu.dimension_semantics<parallel>], iteration_bounds = array<i64: 1>, scalar_prefetch = 0 : i64, scratch_operands = 0 : i64, tpu.core_type = #tpu.core_type<tc>, window_params = [{pipeline_mode = #tpu.pipeline_mode<synchronous>, transform_indices = @transform_0, window_bounds = array<i64: 1, 128>}, {pipeline_mode = #tpu.pipeline_mode<synchronous>, transform_indices = @transform_1, window_bounds = array<i64: 1, 128>}, {transform_indices = @transform_2, window_bounds = array<i64: 512, 128>}, {transform_indices = @transform_3, window_bounds = array<i64: 512, 128>}]} {
    %c0 = arith.constant 0 : index
    %c0_0 = arith.constant 0 : index
    %0 = vector.load %arg3[%c0, %c0_0] : memref<512x128xbf16, #tpu.memory_space<vmem>>, vector<512x128xbf16>
    %1 = arith.extf %0 : vector<512x128xbf16> to vector<512x128xf32>
    %c0_1 = arith.constant 0 : index
    %c0_2 = arith.constant 0 : index
    %2 = vector.load %arg1[%c0_1, %c0_2] : memref<1x128xf32, #tpu.memory_space<vmem>>, vector<1x128xf32>
    %3 = vector.broadcast %2 : vector<1x128xf32> to vector<512x128xf32>
    %4 = arith.mulf %1, %3 : vector<512x128xf32>
    %c0_3 = arith.constant 0 : index
    %c0_4 = arith.constant 0 : index
    %5 = vector.load %arg2[%c0_3, %c0_4] : memref<1x128xf32, #tpu.memory_space<vmem>>, vector<1x128xf32>
    %6 = vector.broadcast %5 : vector<1x128xf32> to vector<512x128xf32>
    %7 = arith.addf %4, %6 : vector<512x128xf32>
    %cst = arith.constant 0.000000e+00 : f32
    %8 = vector.broadcast %cst : f32 to vector<512x128xf32>
    %9 = arith.maximumf %7, %8 : vector<512x128xf32>
    %c0_5 = arith.constant 0 : index
    %c0_6 = arith.constant 0 : index
    %10 = vector.load %arg4[%c0_5, %c0_6] : memref<512x128xf32, #tpu.memory_space<vmem>>, vector<512x128xf32>
    tpu.vector_store %arg4[%c0_5, %c0_6], %9 {strides = array<i32>} : memref<512x128xf32, #tpu.memory_space<vmem>>, vector<512x128xf32>,
    return
  }
  func.func @transform_0(%arg0: i32) -> (i32, i32) {
    %c0_i32 = arith.constant 0 : i32
    %c0_i32_0 = arith.constant 0 : i32
    %c0_i32_1 = arith.constant 0 : i32
    return %c0_i32, %c0_i32_0 : i32, i32
  }
  func.func @transform_1(%arg0: i32) -> (i32, i32) {
    %c0_i32 = arith.constant 0 : i32
    %c0_i32_0 = arith.constant 0 : i32
    %c0_i32_1 = arith.constant 0 : i32
    return %c0_i32, %c0_i32_0 : i32, i32
  }
  func.func @transform_2(%arg0: i32) -> (i32, i32) {
    %c0_i32 = arith.constant 0 : i32
    %c0_i32_0 = arith.constant 0 : i32
    return %arg0, %c0_i32 : i32, i32
  }
  func.func @transform_3(%arg0: i32) -> (i32, i32) {
    %c0_i32 = arith.constant 0 : i32
    %c0_i32_0 = arith.constant 0 : i32
    return %arg0, %c0_i32 : i32, i32
  }
}

</mosaic_0001>

<llo_original>
// kernel: aspp_forward.3
$region0: #{aspp_forward.3}
  #allocation0 [shape = 'u32[]', space=smem, size = 0x4, offset = 0x4, fixed_abs, tag = 'smem constant byte address 0x4 - core index']
  #allocation1 [shape = 'u32[72,128]{1,0:T(1,128)}', space=vmem, size = 0x9000, scoped, tag = 'internal scratch']
  %s0 = inlined_call_operand.vmem [shape: f32[1,128], index: 0, kind: input, shape index: {}]
  %s1 = inlined_call_operand.vmem [shape: f32[1,128], index: 1, kind: input, shape index: {}]
  %s2 = inlined_call_operand.vmem [shape: bf16[512,128], index: 2, kind: input, shape index: {}]
  %s3 = inlined_call_operand.vmem [shape: f32[512,128], index: 3, kind: output, shape index: {}]
  %s4 = sld [smem:[#allocation0]]
  $region22: #{aspp_forward.3} parent=0
    _
  %s6 = ssub.s32 1, %s4
  %s7 = scalar_select 0, %s6, %s4
  // Predicated region
  $region2: #{aspp_forward.3} parent=0 // pred_check
    _
  $region3: #{aspp_forward.3} parent=0 // pred_check_branch
    %9 = sbr.rel (0) target = $region5
  $region4: #{aspp_forward.3} parent=0 // pred_region
    _
  $region5: #{aspp_forward.3} parent=0 // pred_fallthru
    _
  // Predicated region
  $region6: #{aspp_forward.3} parent=0 // pred_check
    _
  $region7: #{aspp_forward.3} parent=0 // pred_check_branch
    %11 = sbr.rel (0) target = $region9
  $region8: #{aspp_forward.3} parent=0 // pred_region
    _
  $region9: #{aspp_forward.3} parent=0 // pred_fallthru
    _
  // Predicated region
  $region10: #{aspp_forward.3} parent=0 // pred_check
    _
  $region11: #{aspp_forward.3} parent=0 // pred_check_branch
    %13 = sbr.rel (0) target = $region13
  $region12: #{aspp_forward.3} parent=0 // pred_region
    _
  $region13: #{aspp_forward.3} parent=0 // pred_fallthru
    _
  %v14 = vld [vmem:[%s2] sm:$0xf]
  %v15 = vld [vmem:[%s2 + $0x4] sm:$0xf]
  %v16 = vld [vmem:[%s2 + $0x8] sm:$0xf]
  %v17 = vld [vmem:[%s2 + $0xc] sm:$0xf]
  %v18 = vld [vmem:[%s2 + $0x10] sm:$0xf]
  %v19 = vld [vmem:[%s2 + $0x14] sm:$0xf]
  %v20 = vld [vmem:[%s2 + $0x18] sm:$0xf]
  %v21 = vld [vmem:[%s2 + $0x1c] sm:$0xf]
  %v22 = vld [vmem:[%s2 + $0x20] sm:$0xf]
  %v23 = vld [vmem:[%s2 + $0x24] sm:$0xf]
  %v24 = vld [vmem:[%s2 + $0x28] sm:$0xf]
  %v25 = vld [vmem:[%s2 + $0x2c] sm:$0xf]
  %v26 = vld [vmem:[%s2 + $0x30] sm:$0xf]
  %v27 = vld [vmem:[%s2 + $0x34] sm:$0xf]
  %v28 = vld [vmem:[%s2 + $0x38] sm:$0xf]
  %v29 = vld [vmem:[%s2 + $0x3c] sm:$0xf]
  %v30 = vld [vmem:[%s2 + $0x40] sm:$0xf]
  %v31 = vld [vmem:[%s2 + $0x44] sm:$0xf]
  %v32 = vld [vmem:[%s2 + $0x48] sm:$0xf]
  %v33 = vld [vmem:[%s2 + $0x4c] sm:$0xf]
  %v34 = vld [vmem:[%s2 + $0x50] sm:$0xf]
  %v35 = vld [vmem:[%s2 + $0x54] sm:$0xf]
  %v36 = vld [vmem:[%s2 + $0x58] sm:$0xf]
  %v37 = vld [vmem:[%s2 + $0x5c] sm:$0xf]
  %v38 = vld [vmem:[%s2 + $0x60] sm:$0xf]
  %v39 = vld [vmem:[%s2 + $0x64] sm:$0xf]
  %v40 = vld [vmem:[%s2 + $0x68] sm:$0xf]
  %v41 = vld [vmem:[%s2 + $0x6c] sm:$0xf]
  %v42 = vld [vmem:[%s2 + $0x70] sm:$0xf]
  %v43 = vld [vmem:[%s2 + $0x74] sm:$0xf]
  %v44 = vld [vmem:[%s2 + $0x78] sm:$0xf]
  %v45 = vld [vmem:[%s2 + $0x7c] sm:$0xf]
  %v46 = vld [vmem:[%s2 + $0x80] sm:$0xf]
  %v47 = vld [vmem:[%s2 + $0x84] sm:$0xf]
  %v48 = vld [vmem:[%s2 + $0x88] sm:$0xf]
  %v49 = vld [vmem:[%s2 + $0x8c] sm:$0xf]
  %v50 = vld [vmem:[%s2 + $0x90] sm:$0xf]
  %v51 = vld [vmem:[%s2 + $0x94] sm:$0xf]
  %v52 = vld [vmem:[%s2 + $0x98] sm:$0xf]
  %v53 = vld [vmem:[%s2 + $0x9c] sm:$0xf]
  %v54 = vld [vmem:[%s2 + $0xa0] sm:$0xf]
  %v55 = vld [vmem:[%s2 + $0xa4] sm:$0xf]
  %v56 = vld [vmem:[%s2 + $0xa8] sm:$0xf]
  %v57 = vld [vmem:[%s2 + $0xac] sm:$0xf]
  %v58 = vld [vmem:[%s2 + $0xb0] sm:$0xf]
  %v59 = vld [vmem:[%s2 + $0xb4] sm:$0xf]
  %v60 = vld [vmem:[%s2 + $0xb8] sm:$0xf]
  %v61 = vld [vmem:[%s2 + $0xbc] sm:$0xf]
  %v62 = vld [vmem:[%s2 + $0xc0] sm:$0xf]
  %v63 = vld [vmem:[%s2 + $0xc4] sm:$0xf]
  %v64 = vld [vmem:[%s2 + $0xc8] sm:$0xf]
  %v65 = vld [vmem:[%s2 + $0xcc] sm:$0xf]
  %v66 = vld [vmem:[%s2 + $0xd0] sm:$0xf]
  %v67 = vld [vmem:[%s2 + $0xd4] sm:$0xf]
  %v68 = vld [vmem:[%s2 + $0xd8] sm:$0xf]
  %v69 = vld [vmem:[%s2 + $0xdc] sm:$0xf]
  %v70 = vld [vmem:[%s2 + $0xe0] sm:$0xf]
  %v71 = vld [vmem:[%s2 + $0xe4] sm:$0xf]
  %v72 = vld [vmem:[%s2 + $0xe8] sm:$0xf]
  %v73 = vld [vmem:[%s2 + $0xec] sm:$0xf]
  %v74 = vld [vmem:[%s2 + $0xf0] sm:$0xf]
  %v75 = vld [vmem:[%s2 + $0xf4] sm:$0xf]
  %v76 = vld [vmem:[%s2 + $0xf8] sm:$0xf]
  %v77 = vld [vmem:[%s2 + $0xfc] sm:$0xf]
  %v78 = vunpack.c.l.bf16 %v14
  %v79 = vunpack.c.l.bf16 %v15
  %v80 = vunpack.c.l.bf16 %v16
  %v81 = vunpack.c.l.bf16 %v17
  %v82 = vunpack.c.l.bf16 %v18
  %v83 = vunpack.c.l.bf16 %v19
  %v84 = vunpack.c.l.bf16 %v20
  %v85 = vunpack.c.l.bf16 %v21
  %v86 = vunpack.c.l.bf16 %v22
  %v87 = vunpack.c.l.bf16 %v23
  %v88 = vunpack.c.l.bf16 %v24
  %v89 = vunpack.c.l.bf16 %v25
  %v90 = vunpack.c.l.bf16 %v26
  %v91 = vunpack.c.l.bf16 %v27
  %v92 = vunpack.c.l.bf16 %v28
  %v93 = vunpack.c.l.bf16 %v29
  %v94 = vunpack.c.l.bf16 %v30
  %v95 = vunpack.c.l.bf16 %v31
  %v96 = vunpack.c.l.bf16 %v32
  %v97 = vunpack.c.l.bf16 %v33
  %v98 = vunpack.c.l.bf16 %v34
  %v99 = vunpack.c.l.bf16 %v35
  %v100 = vunpack.c.l.bf16 %v36
  %v101 = vunpack.c.l.bf16 %v37
  %v102 = vunpack.c.l.bf16 %v38
  %v103 = vunpack.c.l.bf16 %v39
  %v104 = vunpack.c.l.bf16 %v40
  %v105 = vunpack.c.l.bf16 %v41
  %v106 = vunpack.c.l.bf16 %v42
  %v107 = vunpack.c.l.bf16 %v43
  %v108 = vunpack.c.l.bf16 %v44
  %v109 = vunpack.c.l.bf16 %v45
  %v110 = vunpack.c.l.bf16 %v46
  %v111 = vunpack.c.l.bf16 %v47
  %v112 = vunpack.c.l.bf16 %v48
  %v113 = vunpack.c.l.bf16 %v49
  %v114 = vunpack.c.l.bf16 %v50
  %v115 = vunpack.c.l.bf16 %v51
  %v116 = vunpack.c.l.bf16 %v52
  %v117 = vunpack.c.l.bf16 %v53
  %v118 = vunpack.c.l.bf16 %v54
  %v119 = vunpack.c.l.bf16 %v55
  %v120 = vunpack.c.l.bf16 %v56
  %v121 = vunpack.c.l.bf16 %v57
  %v122 = vunpack.c.l.bf16 %v58
  %v123 = vunpack.c.l.bf16 %v59
  %v124 = vunpack.c.l.bf16 %v60
  %v125 = vunpack.c.l.bf16 %v61
  %v126 = vunpack.c.l.bf16 %v62
  %v127 = vunpack.c.l.bf16 %v63
  %v128 = vunpack.c.l.bf16 %v64
  %v129 = vunpack.c.l.bf16 %v65
  %v130 = vunpack.c.l.bf16 %v66
  %v131 = vunpack.c.l.bf16 %v67
  %v132 = vunpack.c.l.bf16 %v68
  %v133 = vunpack.c.l.bf16 %v69
  %v134 = vunpack.c.l.bf16 %v70
  %v135 = vunpack.c.l.bf16 %v71
  %v136 = vunpack.c.l.bf16 %v72
  %v137 = vunpack.c.l.bf16 %v73
  %v138 = vunpack.c.l.bf16 %v74
  %v139 = vunpack.c.l.bf16 %v75
  %v140 = vunpack.c.l.bf16 %v76
  %v141 = vunpack.c.l.bf16 %v77
  %v142 = vld [vmem:[%s0] sm:$0x1]
  %v144 = vperm.slane %v142, 0
  %v146 = vmul.f32 %v78, %v144
  %v147 = vmul.f32 %v79, %v144
  %v148 = vmul.f32 %v80, %v144
  %v149 = vmul.f32 %v81, %v144
  %v150 = vmul.f32 %v82, %v144
  %v151 = vmul.f32 %v83, %v144
  %v152 = vmul.f32 %v84, %v144
  %v153 = vmul.f32 %v85, %v144
  %v154 = vmul.f32 %v86, %v144
  %v155 = vmul.f32 %v87, %v144
  %v156 = vmul.f32 %v88, %v144
  %v157 = vmul.f32 %v89, %v144
  %v158 = vmul.f32 %v90, %v144
  %v159 = vmul.f32 %v91, %v144
  %v160 = vmul.f32 %v92, %v144
  %v161 = vmul.f32 %v93, %v144
  %v162 = vmul.f32 %v94, %v144
  %v163 = vmul.f32 %v95, %v144
  %v164 = vmul.f32 %v96, %v144
  %v165 = vmul.f32 %v97, %v144
  %v166 = vmul.f32 %v98, %v144
  %v167 = vmul.f32 %v99, %v144
  %v168 = vmul.f32 %v100, %v144
  %v169 = vmul.f32 %v101, %v144
  %v170 = vmul.f32 %v102, %v144
  %v171 = vmul.f32 %v103, %v144
  %v172 = vmul.f32 %v104, %v144
  %v173 = vmul.f32 %v105, %v144
  %v174 = vmul.f32 %v106, %v144
  %v175 = vmul.f32 %v107, %v144
  %v176 = vmul.f32 %v108, %v144
  %v177 = vmul.f32 %v109, %v144
  %v178 = vmul.f32 %v110, %v144
  %v179 = vmul.f32 %v111, %v144
  %v180 = vmul.f32 %v112, %v144
  %v181 = vmul.f32 %v113, %v144
  %v182 = vmul.f32 %v114, %v144
  %v183 = vmul.f32 %v115, %v144
  %v184 = vmul.f32 %v116, %v144
  %v185 = vmul.f32 %v117, %v144
  %v186 = vmul.f32 %v118, %v144
  %v187 = vmul.f32 %v119, %v144
  %v188 = vmul.f32 %v120, %v144
  %v189 = vmul.f32 %v121, %v144
  %v190 = vmul.f32 %v122, %v144
  %v191 = vmul.f32 %v123, %v144
  %v192 = vmul.f32 %v124, %v144
  %v193 = vmul.f32 %v125, %v144
  %v194 = vmul.f32 %v126, %v144
  %v195 = vmul.f32 %v127, %v144
  %v196 = vmul.f32 %v128, %v144
  %v197 = vmul.f32 %v129, %v144
  %v198 = vmul.f32 %v130, %v144
  %v199 = vmul.f32 %v131, %v144
  %v200 = vmul.f32 %v132, %v144
  %v201 = vmul.f32 %v133, %v144
  %v202 = vmul.f32 %v134, %v144
  %v203 = vmul.f32 %v135, %v144
  %v204 = vmul.f32 %v136, %v144
  %v205 = vmul.f32 %v137, %v144
  %v206 = vmul.f32 %v138, %v144
  %v207 = vmul.f32 %v139, %v144
  %v208 = vmul.f32 %v140, %v144
  %v209 = vmul.f32 %v141, %v144
  %v210 = vld [vmem:[%s1] sm:$0x1]
  %v212 = vperm.slane %v210, 0
  %v214 = vadd.f32 %v146, %v212
  %v215 = vadd.f32 %v147, %v212
  %v216 = vadd.f32 %v148, %v212
  %v217 = vadd.f32 %v149, %v212
  %v218 = vadd.f32 %v150, %v212
  %v219 = vadd.f32 %v151, %v212
  %v220 = vadd.f32 %v152, %v212
  %v221 = vadd.f32 %v153, %v212
  %v222 = vadd.f32 %v154, %v212
  %v223 = vadd.f32 %v155, %v212
  %v224 = vadd.f32 %v156, %v212
  %v225 = vadd.f32 %v157, %v212
  %v226 = vadd.f32 %v158, %v212
  %v227 = vadd.f32 %v159, %v212
  %v228 = vadd.f32 %v160, %v212
  %v229 = vadd.f32 %v161, %v212
  %v230 = vadd.f32 %v162, %v212
  %v231 = vadd.f32 %v163, %v212
  %v232 = vadd.f32 %v164, %v212
  %v233 = vadd.f32 %v165, %v212
  %v234 = vadd.f32 %v166, %v212
  %v235 = vadd.f32 %v167, %v212
  %v236 = vadd.f32 %v168, %v212
  %v237 = vadd.f32 %v169, %v212
  %v238 = vadd.f32 %v170, %v212
  %v239 = vadd.f32 %v171, %v212
  %v240 = vadd.f32 %v172, %v212
  %v241 = vadd.f32 %v173, %v212
  %v242 = vadd.f32 %v174, %v212
  %v243 = vadd.f32 %v175, %v212
  %v244 = vadd.f32 %v176, %v212
  %v245 = vadd.f32 %v177, %v212
  %v246 = vadd.f32 %v178, %v212
  %v247 = vadd.f32 %v179, %v212
  %v248 = vadd.f32 %v180, %v212
  %v249 = vadd.f32 %v181, %v212
  %v250 = vadd.f32 %v182, %v212
  %v251 = vadd.f32 %v183, %v212
  %v252 = vadd.f32 %v184, %v212
  %v253 = vadd.f32 %v185, %v212
  %v254 = vadd.f32 %v186, %v212
  %v255 = vadd.f32 %v187, %v212
  %v256 = vadd.f32 %v188, %v212
  %v257 = vadd.f32 %v189, %v212
  %v258 = vadd.f32 %v190, %v212
  %v259 = vadd.f32 %v191, %v212
  %v260 = vadd.f32 %v192, %v212
  %v261 = vadd.f32 %v193, %v212
  %v262 = vadd.f32 %v194, %v212
  %v263 = vadd.f32 %v195, %v212
  %v264 = vadd.f32 %v196, %v212
  %v265 = vadd.f32 %v197, %v212
  %v266 = vadd.f32 %v198, %v212
  %v267 = vadd.f32 %v199, %v212
  %v268 = vadd.f32 %v200, %v212
  %v269 = vadd.f32 %v201, %v212
  %v270 = vadd.f32 %v202, %v212
  %v271 = vadd.f32 %v203, %v212
  %v272 = vadd.f32 %v204, %v212
  %v273 = vadd.f32 %v205, %v212
  %v274 = vadd.f32 %v206, %v212
  %v275 = vadd.f32 %v207, %v212
  %v276 = vadd.f32 %v208, %v212
  %v277 = vadd.f32 %v209, %v212
  %v278 = vmax.f32 %v214, 0.0
  %v279 = vmax.f32 %v215, 0.0
  %v280 = vmax.f32 %v216, 0.0
  %v281 = vmax.f32 %v217, 0.0
  %v282 = vmax.f32 %v218, 0.0
  %v283 = vmax.f32 %v219, 0.0
  %v284 = vmax.f32 %v220, 0.0
  %v285 = vmax.f32 %v221, 0.0
  %v286 = vmax.f32 %v222, 0.0
  %v287 = vmax.f32 %v223, 0.0
  %v288 = vmax.f32 %v224, 0.0
  %v289 = vmax.f32 %v225, 0.0
  %v290 = vmax.f32 %v226, 0.0
  %v291 = vmax.f32 %v227, 0.0
  %v292 = vmax.f32 %v228, 0.0
  %v293 = vmax.f32 %v229, 0.0
  %v294 = vmax.f32 %v230, 0.0
  %v295 = vmax.f32 %v231, 0.0
  %v296 = vmax.f32 %v232, 0.0
  %v297 = vmax.f32 %v233, 0.0
  %v298 = vmax.f32 %v234, 0.0
  %v299 = vmax.f32 %v235, 0.0
  %v300 = vmax.f32 %v236, 0.0
  %v301 = vmax.f32 %v237, 0.0
  %v302 = vmax.f32 %v238, 0.0
  %v303 = vmax.f32 %v239, 0.0
  %v304 = vmax.f32 %v240, 0.0
  %v305 = vmax.f32 %v241, 0.0
  %v306 = vmax.f32 %v242, 0.0
  %v307 = vmax.f32 %v243, 0.0
  %v308 = vmax.f32 %v244, 0.0
  %v309 = vmax.f32 %v245, 0.0
  %v310 = vmax.f32 %v246, 0.0
  %v311 = vmax.f32 %v247, 0.0
  %v312 = vmax.f32 %v248, 0.0
  %v313 = vmax.f32 %v249, 0.0
  %v314 = vmax.f32 %v250, 0.0
  %v315 = vmax.f32 %v251, 0.0
  %v316 = vmax.f32 %v252, 0.0
  %v317 = vmax.f32 %v253, 0.0
  %v318 = vmax.f32 %v254, 0.0
  %v319 = vmax.f32 %v255, 0.0
  %v320 = vmax.f32 %v256, 0.0
  %v321 = vmax.f32 %v257, 0.0
  %v322 = vmax.f32 %v258, 0.0
  %v323 = vmax.f32 %v259, 0.0
  %v324 = vmax.f32 %v260, 0.0
  %v325 = vmax.f32 %v261, 0.0
  %v326 = vmax.f32 %v262, 0.0
  %v327 = vmax.f32 %v263, 0.0
  %v328 = vmax.f32 %v264, 0.0
  %v329 = vmax.f32 %v265, 0.0
  %v330 = vmax.f32 %v266, 0.0
  %v331 = vmax.f32 %v267, 0.0
  %v332 = vmax.f32 %v268, 0.0
  %v333 = vmax.f32 %v269, 0.0
  %v334 = vmax.f32 %v270, 0.0
  %v335 = vmax.f32 %v271, 0.0
  %v336 = vmax.f32 %v272, 0.0
  %v337 = vmax.f32 %v273, 0.0
  %v338 = vmax.f32 %v274, 0.0
  %v339 = vmax.f32 %v275, 0.0
  %v340 = vmax.f32 %v276, 0.0
  %v341 = vmax.f32 %v277, 0.0
  %342 = vst [vmem:[%s3] sm:$0xff] %v278
  %343 = vst [vmem:[%s3 + $0x8] sm:$0xff] %v279
  %344 = vst [vmem:[%s3 + $0x10] sm:$0xff] %v280
  %345 = vst [vmem:[%s3 + $0x18] sm:$0xff] %v281
  %346 = vst [vmem:[%s3 + $0x20] sm:$0xff] %v282
  %347 = vst [vmem:[%s3 + $0x28] sm:$0xff] %v283
  %348 = vst [vmem:[%s3 + $0x30] sm:$0xff] %v284
  %349 = vst [vmem:[%s3 + $0x38] sm:$0xff] %v285
  %350 = vst [vmem:[%s3 + $0x40] sm:$0xff] %v286
  %351 = vst [vmem:[%s3 + $0x48] sm:$0xff] %v287
  %352 = vst [vmem:[%s3 + $0x50] sm:$0xff] %v288
  %353 = vst [vmem:[%s3 + $0x58] sm:$0xff] %v289
  %354 = vst [vmem:[%s3 + $0x60] sm:$0xff] %v290
  %355 = vst [vmem:[%s3 + $0x68] sm:$0xff] %v291
  %356 = vst [vmem:[%s3 + $0x70] sm:$0xff] %v292
  %357 = vst [vmem:[%s3 + $0x78] sm:$0xff] %v293
  %358 = vst [vmem:[%s3 + $0x80] sm:$0xff] %v294
  %359 = vst [vmem:[%s3 + $0x88] sm:$0xff] %v295
  %360 = vst [vmem:[%s3 + $0x90] sm:$0xff] %v296
  %361 = vst [vmem:[%s3 + $0x98] sm:$0xff] %v297
  %362 = vst [vmem:[%s3 + $0xa0] sm:$0xff] %v298
  %363 = vst [vmem:[%s3 + $0xa8] sm:$0xff] %v299
  %364 = vst [vmem:[%s3 + $0xb0] sm:$0xff] %v300
  %365 = vst [vmem:[%s3 + $0xb8] sm:$0xff] %v301
  %366 = vst [vmem:[%s3 + $0xc0] sm:$0xff] %v302
  %367 = vst [vmem:[%s3 + $0xc8] sm:$0xff] %v303
  %368 = vst [vmem:[%s3 + $0xd0] sm:$0xff] %v304
  %369 = vst [vmem:[%s3 + $0xd8] sm:$0xff] %v305
  %370 = vst [vmem:[%s3 + $0xe0] sm:$0xff] %v306
  %371 = vst [vmem:[%s3 + $0xe8] sm:$0xff] %v307
  %372 = vst [vmem:[%s3 + $0xf0] sm:$0xff] %v308
  %373 = vst [vmem:[%s3 + $0xf8] sm:$0xff] %v309
  %374 = vst [vmem:[%s3 + $0x100] sm:$0xff] %v310
  %375 = vst [vmem:[%s3 + $0x108] sm:$0xff] %v311
  %376 = vst [vmem:[%s3 + $0x110] sm:$0xff] %v312
  %377 = vst [vmem:[%s3 + $0x118] sm:$0xff] %v313
  %378 = vst [vmem:[%s3 + $0x120] sm:$0xff] %v314
  %379 = vst [vmem:[%s3 + $0x128] sm:$0xff] %v315
  %380 = vst [vmem:[%s3 + $0x130] sm:$0xff] %v316
  %381 = vst [vmem:[%s3 + $0x138] sm:$0xff] %v317
  %382 = vst [vmem:[%s3 + $0x140] sm:$0xff] %v318
  %383 = vst [vmem:[%s3 + $0x148] sm:$0xff] %v319
  %384 = vst [vmem:[%s3 + $0x150] sm:$0xff] %v320
  %385 = vst [vmem:[%s3 + $0x158] sm:$0xff] %v321
  %386 = vst [vmem:[%s3 + $0x160] sm:$0xff] %v322
  %387 = vst [vmem:[%s3 + $0x168] sm:$0xff] %v323
  %388 = vst [vmem:[%s3 + $0x170] sm:$0xff] %v324
  %389 = vst [vmem:[%s3 + $0x178] sm:$0xff] %v325
  %390 = vst [vmem:[%s3 + $0x180] sm:$0xff] %v326
  %391 = vst [vmem:[%s3 + $0x188] sm:$0xff] %v327
  %392 = vst [vmem:[%s3 + $0x190] sm:$0xff] %v328
  %393 = vst [vmem:[%s3 + $0x198] sm:$0xff] %v329
  %394 = vst [vmem:[%s3 + $0x1a0] sm:$0xff] %v330
  %395 = vst [vmem:[%s3 + $0x1a8] sm:$0xff] %v331
  %396 = vst [vmem:[%s3 + $0x1b0] sm:$0xff] %v332
  %397 = vst [vmem:[%s3 + $0x1b8] sm:$0xff] %v333
  %398 = vst [vmem:[%s3 + $0x1c0] sm:$0xff] %v334
  %399 = vst [vmem:[%s3 + $0x1c8] sm:$0xff] %v335
  %400 = vst [vmem:[%s3 + $0x1d0] sm:$0xff] %v336
  %401 = vst [vmem:[%s3 + $0x1d8] sm:$0xff] %v337
  %402 = vst [vmem:[%s3 + $0x1e0] sm:$0xff] %v338
  %403 = vst [vmem:[%s3 + $0x1e8] sm:$0xff] %v339
  %404 = vst [vmem:[%s3 + $0x1f0] sm:$0xff] %v340
  %405 = vst [vmem:[%s3 + $0x1f8] sm:$0xff] %v341
  // Predicated region
  $region14: #{aspp_forward.3} parent=0 // pred_check
    _
  $region15: #{aspp_forward.3} parent=0 // pred_check_branch
    %407 = sbr.rel (0) target = $region17
  $region16: #{aspp_forward.3} parent=0 // pred_region
    _
  $region17: #{aspp_forward.3} parent=0 // pred_fallthru
    _
  // Predicated region
  $region18: #{aspp_forward.3} parent=0 // pred_check
    _
  $region19: #{aspp_forward.3} parent=0 // pred_check_branch
    %409 = sbr.rel (0) target = $region21
  $region20: #{aspp_forward.3} parent=0 // pred_region
    _
  $region21: #{aspp_forward.3} parent=0 // pred_fallthru
    _

// kernel: aspp_forward.2
$region0: #{aspp_forward.2}
  #allocation0 [shape = 'u32[]', space=smem, size = 0x4, offset = 0x4, fixed_abs, tag = 'smem constant byte address 0x4 - core index']
  #allocation1 [shape = 'u32[72,128]{1,0:T(1,128)}', space=vmem, size = 0x9000, scoped, tag = 'internal scratch']
  #allocation2 [shape = 'f32[256,128]{1,0:T(8,128)}', space=vmem, size = 0x20000, scoped, tag = 'scratch operand']
  #allocation3 [shape = 'f32[8,128]{1,0:T(8,128)}', space=vmem, size = 0x1000, scoped, tag = 'scratch operand']
  #allocation4 [shape = 'f32[8,128]{1,0:T(8,128)}', space=vmem, size = 0x1000, scoped, tag = 'scratch operand']
  %s0 = inlined_call_operand.vmem [shape: bf16[512,128], index: 0, kind: input, shape index: {}]
  %s1 = inlined_call_operand.vmem [shape: bf16[128,128], index: 1, kind: input, shape index: {}]
  %s2 = inlined_call_operand.vmem [shape: bf16[512,128], index: 2, kind: output, shape index: {0}]
  %s3 = inlined_call_operand.vmem [shape: f32[16,128], index: 3, kind: output, shape index: {1}]
  %s4 = inlined_call_operand.vmem [shape: f32[16,128], index: 4, kind: output, shape index: {2}]
  %5 = xla_tuple %s2, %s3, %s4
  %s6 = sld [smem:[#allocation0]]
  $region73: #{aspp_forward.2} parent=0
    _
  %s8 = ssub.s32 1, %s6
  %s9 = scalar_select 0, %s8, %s6
  loop: start=0, step=1, limit=4
  $region2: #{aspp_forward.2} parent=0 // loop_pre_header
    _
  $region3: #{aspp_forward.2} parent=0 // loop_header
    %s11 = sphi 0, %s15
    %p12 = scmp.ge.s32.totalorder %s11, 4
    %s18 = sphi 0, %s37
    %s19 = sphi 0, %s33
    %s20 = sphi 0, %s29
    %s21 = sphi 0, %s18
    %s22 = sphi 0, %s19
    %s23 = sphi 0, %s20
    %s24 = sphi 0, %s21
    %s25 = sphi 0, %s22
    %s26 = sphi 0, %s23
    %s44 = sphi 0, %s46
    %s47 = sphi 0, %s44
    %s48 = sphi 0, %s47
    %s64 = sphi 0, %s48
    %s70 = sphi 0, %s72
    %s73 = sphi 0, %s70
    %s74 = sphi 0, %s73
    %s90 = sphi 0, %s74
    %s98 = sphi 0, %s100
    %s101 = sphi 0, %s98
    %s102 = sphi 0, %s101
    %s118 = sphi 0, %s102
    %s124 = sphi 0, %s126
    %s127 = sphi 0, %s124
    %s128 = sphi 0, %s127
    %s144 = sphi 0, %s128
    %s150 = sphi 0, %s152
    %s153 = sphi 0, %s150
    %s154 = sphi 0, %s153
    %s170 = sphi 0, %s154
  $region4: #{aspp_forward.2} parent=0 // loop_header_branch
    %14 = sbr.rel (%p12) target = $region8
  $region5: #{aspp_forward.2} parent=0 // loop_body
    %s16 = ssub.s32 %s11, 1
    %s17 = ssub.s32 %s11, 2
    %s27 = sadd.s32 1, %s20
    %p28 = scmp.ge.s32.totalorder %s27, 1
    %s29 = scalar_select %p28, 0, %s27
    %s30 = sadd.s32 1, %s19
    %s31 = scalar_select %p28, %s30, %s19
    %p32 = scmp.ge.s32.totalorder %s31, 1
    %s33 = scalar_select %p32, 0, %s31
    %s34 = sadd.s32 1, %s18
    %s35 = scalar_select %p32, %s34, %s18
    %p36 = scmp.ge.s32.totalorder %s35, 2
    %s37 = scalar_select %p36, 0, %s35
    %s38 = sadd.s32 %s18, %s19
    %s39 = sadd.s32 %s37, %s33
    %s40 = ssub.s32 %s38, %s39
    %s41 = ssub.s32 %s20, %s29
    %s42 = sor.u32 %s40, %s41
    %p43 = scmp.eq.s32.totalorder %s42, 0
    %s45 = sadd.s32 %s44, 1
    %s46 = scalar_select %p43, %s44, %s45
    %p49 = pneg %p43
    %p50 = scmp.eq.s32.totalorder %s11, 1
    %p51 = por %p49, %p50
    %p52 = scmp.ne.s32.totalorder %s44, %s47
    %p53 = scmp.eq.s32.totalorder %s11, 0
    %p54 = por %p52, %p53
    %p55 = scmp.ne.s32.totalorder %s44, %s47
    %p56 = scmp.eq.s32.totalorder %s16, 1
    %p57 = por %p55, %p56
    %p58 = scmp.ne.s32.totalorder %s47, %s48
    %p59 = scmp.eq.s32.totalorder %s16, 0
    %p60 = por %p58, %p59
    %p61 = scmp.ne.s32.totalorder %s47, %s48
    %p62 = scmp.eq.s32.totalorder %s17, 1
    %p63 = por %p61, %p62
    %p65 = scmp.ne.s32.totalorder %s48, %s64
    %p66 = scmp.eq.s32.totalorder %s17, 0
    %p67 = por %p65, %p66
    %s68 = ssub.s32 %s20, %s29
    %p69 = scmp.eq.s32.totalorder %s68, 0
    %s71 = sadd.s32 %s70, 1
    %s72 = scalar_select %p69, %s70, %s71
    %p75 = pneg %p69
    %p76 = scmp.eq.s32.totalorder %s11, 1
    %p77 = por %p75, %p76
    %p78 = scmp.ne.s32.totalorder %s70, %s73
    %p79 = scmp.eq.s32.totalorder %s11, 0
    %p80 = por %p78, %p79
    %p81 = scmp.ne.s32.totalorder %s70, %s73
    %p82 = scmp.eq.s32.totalorder %s16, 1
    %p83 = por %p81, %p82
    %p84 = scmp.ne.s32.totalorder %s73, %s74
    %p85 = scmp.eq.s32.totalorder %s16, 0
    %p86 = por %p84, %p85
    %p87 = scmp.ne.s32.totalorder %s73, %s74
    %p88 = scmp.eq.s32.totalorder %s17, 1
    %p89 = por %p87, %p88
    %p91 = scmp.ne.s32.totalorder %s74, %s90
    %p92 = scmp.eq.s32.totalorder %s17, 0
    %p93 = por %p91, %p92
    %s94 = sadd.s32 %s18, %s19
    %s95 = sadd.s32 %s37, %s33
    %s96 = ssub.s32 %s94, %s95
    %p97 = scmp.eq.s32.totalorder %s96, 0
    %s99 = sadd.s32 %s98, 1
    %s100 = scalar_select %p97, %s98, %s99
    %p103 = pneg %p97
    %p104 = scmp.eq.s32.totalorder %s11, 1
    %p105 = por %p103, %p104
    %p106 = scmp.ne.s32.totalorder %s98, %s101
    %p107 = scmp.eq.s32.totalorder %s11, 0
    %p108 = por %p106, %p107
    %p109 = scmp.ne.s32.totalorder %s98, %s101
    %p110 = scmp.eq.s32.totalorder %s16, 1
    %p111 = por %p109, %p110
    %p112 = scmp.ne.s32.totalorder %s101, %s102
    %p113 = scmp.eq.s32.totalorder %s16, 0
    %p114 = por %p112, %p113
    %p115 = scmp.ne.s32.totalorder %s101, %s102
    %p116 = scmp.eq.s32.totalorder %s17, 1
    %p117 = por %p115, %p116
    %p119 = scmp.ne.s32.totalorder %s102, %s118
    %p120 = scmp.eq.s32.totalorder %s17, 0
    %p121 = por %p119, %p120
    %s122 = ssub.s32 %s18, %s37
    %p123 = scmp.eq.s32.totalorder %s122, 0
    %s125 = sadd.s32 %s124, 1
    %s126 = scalar_select %p123, %s124, %s125
    %p129 = pneg %p123
    %p130 = scmp.eq.s32.totalorder %s11, 1
    %p131 = por %p129, %p130
    %p132 = scmp.ne.s32.totalorder %s124, %s127
    %p133 = scmp.eq.s32.totalorder %s11, 0
    %p134 = por %p132, %p133
    %p135 = scmp.ne.s32.totalorder %s124, %s127
    %p136 = scmp.eq.s32.totalorder %s16, 1
    %p137 = por %p135, %p136
    %p138 = scmp.ne.s32.totalorder %s127, %s128
    %p139 = scmp.eq.s32.totalorder %s16, 0
    %p140 = por %p138, %p139
    %p141 = scmp.ne.s32.totalorder %s127, %s128
    %p142 = scmp.eq.s32.totalorder %s17, 1
    %p143 = por %p141, %p142
    %p145 = scmp.ne.s32.totalorder %s128, %s144
    %p146 = scmp.eq.s32.totalorder %s17, 0
    %p147 = por %p145, %p146
    %s148 = ssub.s32 %s18, %s37
    %p149 = scmp.eq.s32.totalorder %s148, 0
    %s151 = sadd.s32 %s150, 1
    %s152 = scalar_select %p149, %s150, %s151
    %p155 = pneg %p149
    %p156 = scmp.eq.s32.totalorder %s11, 1
    %p157 = por %p155, %p156
    %p158 = scmp.ne.s32.totalorder %s150, %s153
    %p159 = scmp.eq.s32.totalorder %s11, 0
    %p160 = por %p158, %p159
    %p161 = scmp.ne.s32.totalorder %s150, %s153
    %p162 = scmp.eq.s32.totalorder %s16, 1
    %p163 = por %p161, %p162
    %p164 = scmp.ne.s32.totalorder %s153, %s154
    %p165 = scmp.eq.s32.totalorder %s16, 0
    %p166 = por %p164, %p165
    %p167 = scmp.ne.s32.totalorder %s153, %s154
    %p168 = scmp.eq.s32.totalorder %s17, 1
    %p169 = por %p167, %p168
    %p171 = scmp.ne.s32.totalorder %s154, %s170
    %p172 = scmp.eq.s32.totalorder %s17, 0
    %p173 = por %p171, %p172
    %p174 = scmp.le.s32.totalorder 1, %s11
    %p175 = scmp.lt.s32.totalorder %s11, 3
    %p176 = pnand %p174, %p175
    %p177 = pneg %p176
    // Predicated region
    $region9: #{aspp_forward.2} parent=5 // pred_check
      _
    $region10: #{aspp_forward.2} parent=5 // pred_check_branch
      %179 = sbr.rel (%p176) target = $region12
    $region11: #{aspp_forward.2} parent=5 // pred_region
      %s180 = ssub.s32 %s11, 1
      // Predicated region
      $region13: #{aspp_forward.2} parent=11 // pred_check
        %p181 = pneg %p86
      $region14: #{aspp_forward.2} parent=11 // pred_check_branch
        %183 = sbr.rel (%p181) target = $region16
      $region15: #{aspp_forward.2} parent=11 // pred_region
        %s184 = smul.u32 16, %s23
        %p185 = scmp.lt.s32.totalorder %s184, 15
        %s186 = scalar_select %p185, %s184, 15
        %s187 = smul.addr %s186, 4
        %s188 = scalar_lea.vmem %s1, %s187
        %s189 = smul.u32 16, %s23
      $region16: #{aspp_forward.2} parent=11 // pred_fallthru
        _
    $region12: #{aspp_forward.2} parent=5 // pred_fallthru
      _
    %p190 = scmp.lt.s32.totalorder %s11, 2
    // Predicated region
    $region17: #{aspp_forward.2} parent=5 // pred_check
      %p191 = pneg %p190
    $region18: #{aspp_forward.2} parent=5 // pred_check_branch
      %193 = sbr.rel (%p191) target = $region20
    $region19: #{aspp_forward.2} parent=5 // pred_region
      // Predicated region
      $region21: #{aspp_forward.2} parent=19 // pred_check
        %p194 = pneg %p54
      $region22: #{aspp_forward.2} parent=19 // pred_check_branch
        %196 = sbr.rel (%p194) target = $region24
      $region23: #{aspp_forward.2} parent=19 // pred_region
        %s197 = sadd.s32 %s18, %s19
        %s198 = smul.u32 32, %s197
        %p199 = scmp.lt.s32.totalorder %s198, 63
        %s200 = scalar_select %p199, %s198, 63
        %p201 = scmp.lt.s32.totalorder %s20, 0
        %s202 = scalar_select %p201, %s20, 0
        %s203 = sadd.s32 %s202, %s200
        %s204 = smul.addr %s203, 4
        %s205 = scalar_lea.vmem %s0, %s204
        %s206 = sadd.s32 %s18, %s19
        %s207 = smul.u32 32, %s206
      $region24: #{aspp_forward.2} parent=19 // pred_fallthru
        _
    $region20: #{aspp_forward.2} parent=5 // pred_fallthru
      _
    %p208 = scmp.le.s32.totalorder 1, %s11
    %p209 = scmp.lt.s32.totalorder %s11, 3
    %p210 = pnand %p208, %p209
    %p211 = pneg %p210
    // Predicated region
    $region25: #{aspp_forward.2} parent=5 // pred_check
      _
    $region26: #{aspp_forward.2} parent=5 // pred_check_branch
      %213 = sbr.rel (%p210) target = $region28
    $region27: #{aspp_forward.2} parent=5 // pred_region
      %s214 = ssub.s32 %s11, 1
      %s215 = sadd.s32 %s21, %s22
      %s216 = smul.u32 32, %s215
      %p217 = scmp.lt.s32.totalorder %s216, 63
      %s218 = scalar_select %p217, %s216, 63
      %p219 = scmp.lt.s32.totalorder %s23, 0
      %s220 = scalar_select %p219, %s23, 0
      %s221 = sadd.s32 %s220, %s218
      %s222 = smul.addr %s221, 4
      %s223 = scalar_lea.vmem %s0, %s222
      %p224 = pneg %p60
      %p225 = pneg %p57
      %s226 = smul.u32 16, %s23
      %p227 = scmp.lt.s32.totalorder %s226, 15
      %s228 = scalar_select %p227, %s226, 15
      %s229 = smul.addr %s228, 4
      %s230 = scalar_lea.vmem %s1, %s229
      %p231 = pneg %p86
      %p232 = pneg %p83
      %p233 = pneg %p114
      %p234 = pneg %p111
      %s235 = sadd.s32 %s21, %s22
      %s236 = smul.u32 32, %s235
      %p237 = scmp.lt.s32.totalorder %s236, 63
      %s238 = scalar_select %p237, %s236, 63
      %s239 = smul.addr %s238, 4
      %s240 = scalar_lea.vmem %s2, %s239
      %p241 = pneg %p140
      %p242 = pneg %p137
      %p243 = scmp.lt.s32.totalorder %s21, 1
      %s244 = scalar_select %p243, %s21, 1
      %s245 = smul.addr %s244, 8
      %s246 = scalar_lea.vmem %s3, %s245
      %p247 = pneg %p166
      %p248 = pneg %p163
      %p249 = scmp.lt.s32.totalorder %s21, 1
      %s250 = scalar_select %p249, %s21, 1
      %s251 = smul.addr %s250, 8
      %s252 = scalar_lea.vmem %s4, %s251
      %s253 = sadd.s32 %s21, %s22
      %s254 = smul.u32 32, %s253
      %p255 = scmp.lt.s32.totalorder %s254, 63
      %s256 = scalar_select %p255, %s254, 63
      %p257 = scmp.lt.s32.totalorder %s23, 0
      %s258 = scalar_select %p257, %s23, 0
      %s259 = sadd.s32 %s258, %s256
      %s260 = smul.addr %s259, 4
      %s261 = scalar_lea.vmem %s0, %s260
      %s262 = sadd.s32 %s21, %s22
      %s263 = smul.u32 32, %s262
      %s264 = smul.u32 16, %s23
      %p265 = scmp.lt.s32.totalorder %s264, 15
      %s266 = scalar_select %p265, %s264, 15
      %s267 = smul.addr %s266, 4
      %s268 = scalar_lea.vmem %s1, %s267
      %s269 = smul.u32 16, %s23
      %s270 = sadd.s32 %s21, %s22
      %s271 = smul.u32 32, %s270
      %p272 = scmp.lt.s32.totalorder %s271, 63
      %s273 = scalar_select %p272, %s271, 63
      %s274 = smul.addr %s273, 4
      %s275 = scalar_lea.vmem %s2, %s274
      %s276 = sadd.s32 %s21, %s22
      %s277 = smul.u32 32, %s276
      %p278 = scmp.lt.s32.totalorder %s21, 1
      %s279 = scalar_select %p278, %s21, 1
      %s280 = smul.addr %s279, 8
      %s281 = scalar_lea.vmem %s3, %s280
      %p282 = scmp.lt.s32.totalorder %s21, 1
      %s283 = scalar_select %p282, %s21, 1
      %s284 = smul.addr %s283, 8
      %s285 = scalar_lea.vmem %s4, %s284
      %p286 = scmp.eq.s32.totalorder %s22, 0
      %p287 = scmp.eq.s32.totalorder %s23, 0
      %p288 = pnand %p286, %p287
      %p289 = pneg %p288
      // Predicated region
      $region29: #{aspp_forward.2} parent=27 // pred_check
        _
      $region30: #{aspp_forward.2} parent=27 // pred_check_branch
        %291 = sbr.rel (%p288) target = $region32
      $region31: #{aspp_forward.2} parent=27 // pred_region
        %292 = vst [vmem:[#allocation3] sm:$0xff] 0.0
        %293 = vst [vmem:[#allocation4] sm:$0xff] 0.0
      $region32: #{aspp_forward.2} parent=27 // pred_fallthru
        _
      // Predicated region
      $region33: #{aspp_forward.2} parent=27 // pred_check
        %p294 = pneg %p287
      $region34: #{aspp_forward.2} parent=27 // pred_check_branch
        %296 = sbr.rel (%p294) target = $region36
      $region35: #{aspp_forward.2} parent=27 // pred_region
        %297 = vst [vmem:[#allocation2] sm:$0xff] 0.0
        %298 = vst [vmem:[#allocation2 + $0x8] sm:$0xff] 0.0
        %299 = vst [vmem:[#allocation2 + $0x10] sm:$0xff] 0.0
        %300 = vst [vmem:[#allocation2 + $0x18] sm:$0xff] 0.0
        %301 = vst [vmem:[#allocation2 + $0x20] sm:$0xff] 0.0
        %302 = vst [vmem:[#allocation2 + $0x28] sm:$0xff] 0.0
        %303 = vst [vmem:[#allocation2 + $0x30] sm:$0xff] 0.0
        %304 = vst [vmem:[#allocation2 + $0x38] sm:$0xff] 0.0
        %305 = vst [vmem:[#allocation2 + $0x40] sm:$0xff] 0.0
        %306 = vst [vmem:[#allocation2 + $0x48] sm:$0xff] 0.0
        %307 = vst [vmem:[#allocation2 + $0x50] sm:$0xff] 0.0
        %308 = vst [vmem:[#allocation2 + $0x58] sm:$0xff] 0.0
        %309 = vst [vmem:[#allocation2 + $0x60] sm:$0xff] 0.0
        %310 = vst [vmem:[#allocation2 + $0x68] sm:$0xff] 0.0
        %311 = vst [vmem:[#allocation2 + $0x70] sm:$0xff] 0.0
        %312 = vst [vmem:[#allocation2 + $0x78] sm:$0xff] 0.0
        %313 = vst [vmem:[#allocation2 + $0x80] sm:$0xff] 0.0
        %314 = vst [vmem:[#allocation2 + $0x88] sm:$0xff] 0.0
        %315 = vst [vmem:[#allocation2 + $0x90] sm:$0xff] 0.0
        %316 = vst [vmem:[#allocation2 + $0x98] sm:$0xff] 0.0
        %317 = vst [vmem:[#allocation2 + $0xa0] sm:$0xff] 0.0
        %318 = vst [vmem:[#allocation2 + $0xa8] sm:$0xff] 0.0
        %319 = vst [vmem:[#allocation2 + $0xb0] sm:$0xff] 0.0
        %320 = vst [vmem:[#allocation2 + $0xb8] sm:$0xff] 0.0
        %321 = vst [vmem:[#allocation2 + $0xc0] sm:$0xff] 0.0
        %322 = vst [vmem:[#allocation2 + $0xc8] sm:$0xff] 0.0
        %323 = vst [vmem:[#allocation2 + $0xd0] sm:$0xff] 0.0
        %324 = vst [vmem:[#allocation2 + $0xd8] sm:$0xff] 0.0
        %325 = vst [vmem:[#allocation2 + $0xe0] sm:$0xff] 0.0
        %326 = vst [vmem:[#allocation2 + $0xe8] sm:$0xff] 0.0
        %327 = vst [vmem:[#allocation2 + $0xf0] sm:$0xff] 0.0
        %328 = vst [vmem:[#allocation2 + $0xf8] sm:$0xff] 0.0
      $region36: #{aspp_forward.2} parent=27 // pred_fallthru
        _
      %v329 = vld [vmem:[#allocation2] sm:$0xff]
      %v330 = vld [vmem:[#allocation2 + $0x8] sm:$0xff]
      %v331 = vld [vmem:[#allocation2 + $0x10] sm:$0xff]
      %v332 = vld [vmem:[#allocation2 + $0x18] sm:$0xff]
      %v333 = vld [vmem:[#allocation2 + $0x20] sm:$0xff]
      %v334 = vld [vmem:[#allocation2 + $0x28] sm:$0xff]
      %v335 = vld [vmem:[#allocation2 + $0x30] sm:$0xff]
      %v336 = vld [vmem:[#allocation2 + $0x38] sm:$0xff]
      %v337 = vld [vmem:[#allocation2 + $0x40] sm:$0xff]
      %v338 = vld [vmem:[#allocation2 + $0x48] sm:$0xff]
      %v339 = vld [vmem:[#allocation2 + $0x50] sm:$0xff]
      %v340 = vld [vmem:[#allocation2 + $0x58] sm:$0xff]
      %v341 = vld [vmem:[#allocation2 + $0x60] sm:$0xff]
      %v342 = vld [vmem:[#allocation2 + $0x68] sm:$0xff]
      %v343 = vld [vmem:[#allocation2 + $0x70] sm:$0xff]
      %v344 = vld [vmem:[#allocation2 + $0x78] sm:$0xff]
      %v345 = vld [vmem:[#allocation2 + $0x80] sm:$0xff]
      %v346 = vld [vmem:[#allocation2 + $0x88] sm:$0xff]
      %v347 = vld [vmem:[#allocation2 + $0x90] sm:$0xff]
      %v348 = vld [vmem:[#allocation2 + $0x98] sm:$0xff]
      %v349 = vld [vmem:[#allocation2 + $0xa0] sm:$0xff]
      %v350 = vld [vmem:[#allocation2 + $0xa8] sm:$0xff]
      %v351 = vld [vmem:[#allocation2 + $0xb0] sm:$0xff]
      %v352 = vld [vmem:[#allocation2 + $0xb8] sm:$0xff]
      %v353 = vld [vmem:[#allocation2 + $0xc0] sm:$0xff]
      %v354 = vld [vmem:[#allocation2 + $0xc8] sm:$0xff]
      %v355 = vld [vmem:[#allocation2 + $0xd0] sm:$0xff]
      %v356 = vld [vmem:[#allocation2 + $0xd8] sm:$0xff]
      %v357 = vld [vmem:[#allocation2 + $0xe0] sm:$0xff]
      %v358 = vld [vmem:[#allocation2 + $0xe8] sm:$0xff]
      %v359 = vld [vmem:[#allocation2 + $0xf0] sm:$0xff]
      %v360 = vld [vmem:[#allocation2 + $0xf8] sm:$0xff]
      %v361 = vld [vmem:[%s261] sm:$0xf]
      %v362 = vld [vmem:[%s261 + $0x4] sm:$0xf]
      %v363 = vld [vmem:[%s261 + $0x8] sm:$0xf]
      %v364 = vld [vmem:[%s261 + $0xc] sm:$0xf]
      %v365 = vld [vmem:[%s261 + $0x10] sm:$0xf]
      %v366 = vld [vmem:[%s261 + $0x14] sm:$0xf]
      %v367 = vld [vmem:[%s261 + $0x18] sm:$0xf]
      %v368 = vld [vmem:[%s261 + $0x1c] sm:$0xf]
      %v369 = vld [vmem:[%s261 + $0x20] sm:$0xf]
      %v370 = vld [vmem:[%s261 + $0x24] sm:$0xf]
      %v371 = vld [vmem:[%s261 + $0x28] sm:$0xf]
      %v372 = vld [vmem:[%s261 + $0x2c] sm:$0xf]
      %v373 = vld [vmem:[%s261 + $0x30] sm:$0xf]
      %v374 = vld [vmem:[%s261 + $0x34] sm:$0xf]
      %v375 = vld [vmem:[%s261 + $0x38] sm:$0xf]
      %v376 = vld [vmem:[%s261 + $0x3c] sm:$0xf]
      %v377 = vld [vmem:[%s261 + $0x40] sm:$0xf]
      %v378 = vld [vmem:[%s261 + $0x44] sm:$0xf]
      %v379 = vld [vmem:[%s261 + $0x48] sm:$0xf]
      %v380 = vld [vmem:[%s261 + $0x4c] sm:$0xf]
      %v381 = vld [vmem:[%s261 + $0x50] sm:$0xf]
      %v382 = vld [vmem:[%s261 + $0x54] sm:$0xf]
      %v383 = vld [vmem:[%s261 + $0x58] sm:$0xf]
      %v384 = vld [vmem:[%s261 + $0x5c] sm:$0xf]
      %v385 = vld [vmem:[%s261 + $0x60] sm:$0xf]
      %v386 = vld [vmem:[%s261 + $0x64] sm:$0xf]
      %v387 = vld [vmem:[%s261 + $0x68] sm:$0xf]
      %v388 = vld [vmem:[%s261 + $0x6c] sm:$0xf]
      %v389 = vld [vmem:[%s261 + $0x70] sm:$0xf]
      %v390 = vld [vmem:[%s261 + $0x74] sm:$0xf]
      %v391 = vld [vmem:[%s261 + $0x78] sm:$0xf]
      %v392 = vld [vmem:[%s261 + $0x7c] sm:$0xf]
      %v393 = vld [vmem:[%s268] sm:$0xf]
      %v394 = vld [vmem:[%s268 + $0x4] sm:$0xf]
      %v395 = vld [vmem:[%s268 + $0x8] sm:$0xf]
      %v396 = vld [vmem:[%s268 + $0xc] sm:$0xf]
      %v397 = vld [vmem:[%s268 + $0x10] sm:$0xf]
      %v398 = vld [vmem:[%s268 + $0x14] sm:$0xf]
      %v399 = vld [vmem:[%s268 + $0x18] sm:$0xf]
      %v400 = vld [vmem:[%s268 + $0x1c] sm:$0xf]
      %v401 = vld [vmem:[%s268 + $0x20] sm:$0xf]
      %v402 = vld [vmem:[%s268 + $0x24] sm:$0xf]
      %v403 = vld [vmem:[%s268 + $0x28] sm:$0xf]
      %v404 = vld [vmem:[%s268 + $0x2c] sm:$0xf]
      %v405 = vld [vmem:[%s268 + $0x30] sm:$0xf]
      %v406 = vld [vmem:[%s268 + $0x34] sm:$0xf]
      %v407 = vld [vmem:[%s268 + $0x38] sm:$0xf]
      %v408 = vld [vmem:[%s268 + $0x3c] sm:$0xf]
      %v441 = vunpack.c.l.b16 %v361
      %v442 = vunpack.c.l.b16 %v362
      %v443 = vunpack.c.l.b16 %v363
      %v444 = vunpack.c.l.b16 %v364
      %v445 = vunpack.c.l.b16 %v365
      %v446 = vunpack.c.l.b16 %v366
      %v447 = vunpack.c.l.b16 %v367
      %v448 = vunpack.c.l.b16 %v368
      %v449 = vunpack.c.l.b16 %v369
      %v450 = vunpack.c.l.b16 %v370
      %v451 = vunpack.c.l.b16 %v371
      %v452 = vunpack.c.l.b16 %v372
      %v453 = vunpack.c.l.b16 %v373
      %v454 = vunpack.c.l.b16 %v374
      %v455 = vunpack.c.l.b16 %v375
      %v456 = vunpack.c.l.b16 %v376
      %v457 = vunpack.c.l.b16 %v377
      %v458 = vunpack.c.l.b16 %v378
      %v459 = vunpack.c.l.b16 %v379
      %v460 = vunpack.c.l.b16 %v380
      %v461 = vunpack.c.l.b16 %v381
      %v462 = vunpack.c.l.b16 %v382
      %v463 = vunpack.c.l.b16 %v383
      %v464 = vunpack.c.l.b16 %v384
      %v465 = vunpack.c.l.b16 %v385
      %v466 = vunpack.c.l.b16 %v386
      %v467 = vunpack.c.l.b16 %v387
      %v468 = vunpack.c.l.b16 %v388
      %v469 = vunpack.c.l.b16 %v389
      %v470 = vunpack.c.l.b16 %v390
      %v471 = vunpack.c.l.b16 %v391
      %v472 = vunpack.c.l.b16 %v392
      %v473 = vpack.c.b16 %v442, %v441
      %v474 = vpack.c.b16 %v444, %v443
      %v475 = vpack.c.b16 %v446, %v445
      %v476 = vpack.c.b16 %v448, %v447
      %v477 = vpack.c.b16 %v450, %v449
      %v478 = vpack.c.b16 %v452, %v451
      %v479 = vpack.c.b16 %v454, %v453
      %v480 = vpack.c.b16 %v456, %v455
      %v481 = vpack.c.b16 %v458, %v457
      %v482 = vpack.c.b16 %v460, %v459
      %v483 = vpack.c.b16 %v462, %v461
      %v484 = vpack.c.b16 %v464, %v463
      %v485 = vpack.c.b16 %v466, %v465
      %v486 = vpack.c.b16 %v468, %v467
      %v487 = vpack.c.b16 %v470, %v469
      %v488 = vpack.c.b16 %v472, %v471
      %v521 = vunpack.c.l.b16 %v393
      %v522 = vunpack.c.l.b16 %v394
      %v523 = vunpack.c.l.b16 %v395
      %v524 = vunpack.c.l.b16 %v396
      %v525 = vunpack.c.l.b16 %v397
      %v526 = vunpack.c.l.b16 %v398
      %v527 = vunpack.c.l.b16 %v399
      %v528 = vunpack.c.l.b16 %v400
      %v529 = vunpack.c.l.b16 %v401
      %v530 = vunpack.c.l.b16 %v402
      %v531 = vunpack.c.l.b16 %v403
      %v532 = vunpack.c.l.b16 %v404
      %v533 = vunpack.c.l.b16 %v405
      %v534 = vunpack.c.l.b16 %v406
      %v535 = vunpack.c.l.b16 %v407
      %v536 = vunpack.c.l.b16 %v408
      %v537 = vpack.c.b16 %v522, %v521
      %v538 = vpack.c.b16 %v524, %v523
      %v539 = vpack.c.b16 %v526, %v525
      %v540 = vpack.c.b16 %v528, %v527
      %v541 = vpack.c.b16 %v530, %v529
      %v542 = vpack.c.b16 %v532, %v531
      %v543 = vpack.c.b16 %v534, %v533
      %v544 = vpack.c.b16 %v536, %v535
      %553 = vmatpush.bf16.msra.mxu0 %v544
      %554 = vmatpush.bf16.msra.mxu0 %v543
      %555 = vmatpush.bf16.msra.mxu0 %v542
      %556 = vmatpush.bf16.msra.mxu0 %v541
      %557 = vmatpush.bf16.msra.mxu0 %v540
      %558 = vmatpush.bf16.msra.mxu0 %v539
      %559 = vmatpush.bf16.msra.mxu0 %v538
      %560 = vmatpush.bf16.msra.mxu0 %v537
      %561 = vmatmul.bf16.gmra.mxu0 %v473
      %v562 = vpop.f32.mrf.mxu0
      %v563 = vadd.f32 0.0, %v562
      %v564 = vpop.f32.mrf.mxu0
      %v565 = vadd.f32 0.0, %v564
      %566 = vmatmul.bf16.gmra.mxu0 %v474
      %v567 = vpop.f32.mrf.mxu0
      %v568 = vadd.f32 0.0, %v567
      %v569 = vpop.f32.mrf.mxu0
      %v570 = vadd.f32 0.0, %v569
      %571 = vmatmul.bf16.gmra.mxu0 %v475
      %v572 = vpop.f32.mrf.mxu0
      %v573 = vadd.f32 0.0, %v572
      %v574 = vpop.f32.mrf.mxu0
      %v575 = vadd.f32 0.0, %v574
      %576 = vmatmul.bf16.gmra.mxu0 %v476
      %v577 = vpop.f32.mrf.mxu0
      %v578 = vadd.f32 0.0, %v577
      %v579 = vpop.f32.mrf.mxu0
      %v580 = vadd.f32 0.0, %v579
      %581 = vmatmul.bf16.gmra.mxu0 %v477
      %v582 = vpop.f32.mrf.mxu0
      %v583 = vadd.f32 0.0, %v582
      %v584 = vpop.f32.mrf.mxu0
      %v585 = vadd.f32 0.0, %v584
      %586 = vmatmul.bf16.gmra.mxu0 %v478
      %v587 = vpop.f32.mrf.mxu0
      %v588 = vadd.f32 0.0, %v587
      %v589 = vpop.f32.mrf.mxu0
      %v590 = vadd.f32 0.0, %v589
      %591 = vmatmul.bf16.gmra.mxu0 %v479
      %v592 = vpop.f32.mrf.mxu0
      %v593 = vadd.f32 0.0, %v592
      %v594 = vpop.f32.mrf.mxu0
      %v595 = vadd.f32 0.0, %v594
      %596 = vmatmul.bf16.gmra.mxu0 %v480
      %v597 = vpop.f32.mrf.mxu0
      %v598 = vadd.f32 0.0, %v597
      %v599 = vpop.f32.mrf.mxu0
      %v600 = vadd.f32 0.0, %v599
      %601 = vmatmul.bf16.gmra.mxu0 %v481
      %v602 = vpop.f32.mrf.mxu0
      %v603 = vadd.f32 0.0, %v602
      %v604 = vpop.f32.mrf.mxu0
      %v605 = vadd.f32 0.0, %v604
      %606 = vmatmul.bf16.gmra.mxu0 %v482
      %v607 = vpop.f32.mrf.mxu0
      %v608 = vadd.f32 0.0, %v607
      %v609 = vpop.f32.mrf.mxu0
      %v610 = vadd.f32 0.0, %v609
      %611 = vmatmul.bf16.gmra.mxu0 %v483
      %v612 = vpop.f32.mrf.mxu0
      %v613 = vadd.f32 0.0, %v612
      %v614 = vpop.f32.mrf.mxu0
      %v615 = vadd.f32 0.0, %v614
      %616 = vmatmul.bf16.gmra.mxu0 %v484
      %v617 = vpop.f32.mrf.mxu0
      %v618 = vadd.f32 0.0, %v617
      %v619 = vpop.f32.mrf.mxu0
      %v620 = vadd.f32 0.0, %v619
      %621 = vmatmul.bf16.gmra.mxu0 %v485
      %v622 = vpop.f32.mrf.mxu0
      %v623 = vadd.f32 0.0, %v622
      %v624 = vpop.f32.mrf.mxu0
      %v625 = vadd.f32 0.0, %v624
      %626 = vmatmul.bf16.gmra.mxu0 %v486
      %v627 = vpop.f32.mrf.mxu0
      %v628 = vadd.f32 0.0, %v627
      %v629 = vpop.f32.mrf.mxu0
      %v630 = vadd.f32 0.0, %v629
      %631 = vmatmul.bf16.gmra.mxu0 %v487
      %v632 = vpop.f32.mrf.mxu0
      %v633 = vadd.f32 0.0, %v632
      %v634 = vpop.f32.mrf.mxu0
      %v635 = vadd.f32 0.0, %v634
      %636 = vmatmul.bf16.gmra.mxu0 %v488
      %v637 = vpop.f32.mrf.mxu0
      %v638 = vadd.f32 0.0, %v637
      %v639 = vpop.f32.mrf.mxu0
      %v640 = vadd.f32 0.0, %v639
      %641 = vdwg.mxu0
      %v642 = vadd.f32 %v329, %v563
      %v643 = vadd.f32 %v330, %v565
      %v644 = vadd.f32 %v331, %v568
      %v645 = vadd.f32 %v332, %v570
      %v646 = vadd.f32 %v333, %v573
      %v647 = vadd.f32 %v334, %v575
      %v648 = vadd.f32 %v335, %v578
      %v649 = vadd.f32 %v336, %v580
      %v650 = vadd.f32 %v337, %v583
      %v651 = vadd.f32 %v338, %v585
      %v652 = vadd.f32 %v339, %v588
      %v653 = vadd.f32 %v340, %v590
      %v654 = vadd.f32 %v341, %v593
      %v655 = vadd.f32 %v342, %v595
      %v656 = vadd.f32 %v343, %v598
      %v657 = vadd.f32 %v344, %v600
      %v658 = vadd.f32 %v345, %v603
      %v659 = vadd.f32 %v346, %v605
      %v660 = vadd.f32 %v347, %v608
      %v661 = vadd.f32 %v348, %v610
      %v662 = vadd.f32 %v349, %v613
      %v663 = vadd.f32 %v350, %v615
      %v664 = vadd.f32 %v351, %v618
      %v665 = vadd.f32 %v352, %v620
      %v666 = vadd.f32 %v353, %v623
      %v667 = vadd.f32 %v354, %v625
      %v668 = vadd.f32 %v355, %v628
      %v669 = vadd.f32 %v356, %v630
      %v670 = vadd.f32 %v357, %v633
      %v671 = vadd.f32 %v358, %v635
      %v672 = vadd.f32 %v359, %v638
      %v673 = vadd.f32 %v360, %v640
      %674 = vst [vmem:[#allocation2] sm:$0xff] %v642
      %675 = vst [vmem:[#allocation2 + $0x8] sm:$0xff] %v643
      %676 = vst [vmem:[#allocation2 + $0x10] sm:$0xff] %v644
      %677 = vst [vmem:[#allocation2 + $0x18] sm:$0xff] %v645
      %678 = vst [vmem:[#allocation2 + $0x20] sm:$0xff] %v646
      %679 = vst [vmem:[#allocation2 + $0x28] sm:$0xff] %v647
      %680 = vst [vmem:[#allocation2 + $0x30] sm:$0xff] %v648
      %681 = vst [vmem:[#allocation2 + $0x38] sm:$0xff] %v649
      %682 = vst [vmem:[#allocation2 + $0x40] sm:$0xff] %v650
      %683 = vst [vmem:[#allocation2 + $0x48] sm:$0xff] %v651
      %684 = vst [vmem:[#allocation2 + $0x50] sm:$0xff] %v652
      %685 = vst [vmem:[#allocation2 + $0x58] sm:$0xff] %v653
      %686 = vst [vmem:[#allocation2 + $0x60] sm:$0xff] %v654
      %687 = vst [vmem:[#allocation2 + $0x68] sm:$0xff] %v655
      %688 = vst [vmem:[#allocation2 + $0x70] sm:$0xff] %v656
      %689 = vst [vmem:[#allocation2 + $0x78] sm:$0xff] %v657
      %690 = vst [vmem:[#allocation2 + $0x80] sm:$0xff] %v658
      %691 = vst [vmem:[#allocation2 + $0x88] sm:$0xff] %v659
      %692 = vst [vmem:[#allocation2 + $0x90] sm:$0xff] %v660
      %693 = vst [vmem:[#allocation2 + $0x98] sm:$0xff] %v661
      %694 = vst [vmem:[#allocation2 + $0xa0] sm:$0xff] %v662
      %695 = vst [vmem:[#allocation2 + $0xa8] sm:$0xff] %v663
      %696 = vst [vmem:[#allocation2 + $0xb0] sm:$0xff] %v664
      %697 = vst [vmem:[#allocation2 + $0xb8] sm:$0xff] %v665
      %698 = vst [vmem:[#allocation2 + $0xc0] sm:$0xff] %v666
      %699 = vst [vmem:[#allocation2 + $0xc8] sm:$0xff] %v667
      %700 = vst [vmem:[#allocation2 + $0xd0] sm:$0xff] %v668
      %701 = vst [vmem:[#allocation2 + $0xd8] sm:$0xff] %v669
      %702 = vst [vmem:[#allocation2 + $0xe0] sm:$0xff] %v670
      %703 = vst [vmem:[#allocation2 + $0xe8] sm:$0xff] %v671
      %704 = vst [vmem:[#allocation2 + $0xf0] sm:$0xff] %v672
      %705 = vst [vmem:[#allocation2 + $0xf8] sm:$0xff] %v673
      // Predicated region
      $region37: #{aspp_forward.2} parent=27 // pred_check
        %p706 = pneg %p287
      $region38: #{aspp_forward.2} parent=27 // pred_check_branch
        %708 = sbr.rel (%p706) target = $region40
      $region39: #{aspp_forward.2} parent=27 // pred_region
        %v709 = vld [vmem:[#allocation2] sm:$0xff]
        %v710 = vld [vmem:[#allocation2 + $0x8] sm:$0xff]
        %v711 = vld [vmem:[#allocation2 + $0x10] sm:$0xff]
        %v712 = vld [vmem:[#allocation2 + $0x18] sm:$0xff]
        %v713 = vld [vmem:[#allocation2 + $0x20] sm:$0xff]
        %v714 = vld [vmem:[#allocation2 + $0x28] sm:$0xff]
        %v715 = vld [vmem:[#allocation2 + $0x30] sm:$0xff]
        %v716 = vld [vmem:[#allocation2 + $0x38] sm:$0xff]
        %v717 = vld [vmem:[#allocation2 + $0x40] sm:$0xff]
        %v718 = vld [vmem:[#allocation2 + $0x48] sm:$0xff]
        %v719 = vld [vmem:[#allocation2 + $0x50] sm:$0xff]
        %v720 = vld [vmem:[#allocation2 + $0x58] sm:$0xff]
        %v721 = vld [vmem:[#allocation2 + $0x60] sm:$0xff]
        %v722 = vld [vmem:[#allocation2 + $0x68] sm:$0xff]
        %v723 = vld [vmem:[#allocation2 + $0x70] sm:$0xff]
        %v724 = vld [vmem:[#allocation2 + $0x78] sm:$0xff]
        %v725 = vld [vmem:[#allocation2 + $0x80] sm:$0xff]
        %v726 = vld [vmem:[#allocation2 + $0x88] sm:$0xff]
        %v727 = vld [vmem:[#allocation2 + $0x90] sm:$0xff]
        %v728 = vld [vmem:[#allocation2 + $0x98] sm:$0xff]
        %v729 = vld [vmem:[#allocation2 + $0xa0] sm:$0xff]
        %v730 = vld [vmem:[#allocation2 + $0xa8] sm:$0xff]
        %v731 = vld [vmem:[#allocation2 + $0xb0] sm:$0xff]
        %v732 = vld [vmem:[#allocation2 + $0xb8] sm:$0xff]
        %v733 = vld [vmem:[#allocation2 + $0xc0] sm:$0xff]
        %v734 = vld [vmem:[#allocation2 + $0xc8] sm:$0xff]
        %v735 = vld [vmem:[#allocation2 + $0xd0] sm:$0xff]
        %v736 = vld [vmem:[#allocation2 + $0xd8] sm:$0xff]
        %v737 = vld [vmem:[#allocation2 + $0xe0] sm:$0xff]
        %v738 = vld [vmem:[#allocation2 + $0xe8] sm:$0xff]
        %v739 = vld [vmem:[#allocation2 + $0xf0] sm:$0xff]
        %v740 = vld [vmem:[#allocation2 + $0xf8] sm:$0xff]
        %v741 = vpack.c.bf16 %v709, %v709
        %v742 = vpack.c.bf16 %v710, %v710
        %v743 = vpack.c.bf16 %v711, %v711
        %v744 = vpack.c.bf16 %v712, %v712
        %v745 = vpack.c.bf16 %v713, %v713
        %v746 = vpack.c.bf16 %v714, %v714
        %v747 = vpack.c.bf16 %v715, %v715
        %v748 = vpack.c.bf16 %v716, %v716
        %v749 = vpack.c.bf16 %v717, %v717
        %v750 = vpack.c.bf16 %v718, %v718
        %v751 = vpack.c.bf16 %v719, %v719
        %v752 = vpack.c.bf16 %v720, %v720
        %v753 = vpack.c.bf16 %v721, %v721
        %v754 = vpack.c.bf16 %v722, %v722
        %v755 = vpack.c.bf16 %v723, %v723
        %v756 = vpack.c.bf16 %v724, %v724
        %v757 = vpack.c.bf16 %v725, %v725
        %v758 = vpack.c.bf16 %v726, %v726
        %v759 = vpack.c.bf16 %v727, %v727
        %v760 = vpack.c.bf16 %v728, %v728
        %v761 = vpack.c.bf16 %v729, %v729
        %v762 = vpack.c.bf16 %v730, %v730
        %v763 = vpack.c.bf16 %v731, %v731
        %v764 = vpack.c.bf16 %v732, %v732
        %v765 = vpack.c.bf16 %v733, %v733
        %v766 = vpack.c.bf16 %v734, %v734
        %v767 = vpack.c.bf16 %v735, %v735
        %v768 = vpack.c.bf16 %v736, %v736
        %v769 = vpack.c.bf16 %v737, %v737
        %v770 = vpack.c.bf16 %v738, %v738
        %v771 = vpack.c.bf16 %v739, %v739
        %v772 = vpack.c.bf16 %v740, %v740
        %773 = vst [vmem:[%s275] sm:$0xf] %v741
        %774 = vst [vmem:[%s275 + $0x4] sm:$0xf] %v742
        %775 = vst [vmem:[%s275 + $0x8] sm:$0xf] %v743
        %776 = vst [vmem:[%s275 + $0xc] sm:$0xf] %v744
        %777 = vst [vmem:[%s275 + $0x10] sm:$0xf] %v745
        %778 = vst [vmem:[%s275 + $0x14] sm:$0xf] %v746
        %779 = vst [vmem:[%s275 + $0x18] sm:$0xf] %v747
        %780 = vst [vmem:[%s275 + $0x1c] sm:$0xf] %v748
        %781 = vst [vmem:[%s275 + $0x20] sm:$0xf] %v749
        %782 = vst [vmem:[%s275 + $0x24] sm:$0xf] %v750
        %783 = vst [vmem:[%s275 + $0x28] sm:$0xf] %v751
        %784 = vst [vmem:[%s275 + $0x2c] sm:$0xf] %v752
        %785 = vst [vmem:[%s275 + $0x30] sm:$0xf] %v753
        %786 = vst [vmem:[%s275 + $0x34] sm:$0xf] %v754
        %787 = vst [vmem:[%s275 + $0x38] sm:$0xf] %v755
        %788 = vst [vmem:[%s275 + $0x3c] sm:$0xf] %v756
        %789 = vst [vmem:[%s275 + $0x40] sm:$0xf] %v757
        %790 = vst [vmem:[%s275 + $0x44] sm:$0xf] %v758
        %791 = vst [vmem:[%s275 + $0x48] sm:$0xf] %v759
        %792 = vst [vmem:[%s275 + $0x4c] sm:$0xf] %v760
        %793 = vst [vmem:[%s275 + $0x50] sm:$0xf] %v761
        %794 = vst [vmem:[%s275 + $0x54] sm:$0xf] %v762
        %795 = vst [vmem:[%s275 + $0x58] sm:$0xf] %v763
        %796 = vst [vmem:[%s275 + $0x5c] sm:$0xf] %v764
        %797 = vst [vmem:[%s275 + $0x60] sm:$0xf] %v765
        %798 = vst [vmem:[%s275 + $0x64] sm:$0xf] %v766
        %799 = vst [vmem:[%s275 + $0x68] sm:$0xf] %v767
        %800 = vst [vmem:[%s275 + $0x6c] sm:$0xf] %v768
        %801 = vst [vmem:[%s275 + $0x70] sm:$0xf] %v769
        %802 = vst [vmem:[%s275 + $0x74] sm:$0xf] %v770
        %803 = vst [vmem:[%s275 + $0x78] sm:$0xf] %v771
        %804 = vst [vmem:[%s275 + $0x7c] sm:$0xf] %v772
        %v805 = vld [vmem:[#allocation3] sm:$0xff]
        %v806 = vadd.f32 %v709, %v710
        %v807 = vadd.f32 %v806, %v711
        %v808 = vadd.f32 %v807, %v712
        %v809 = vadd.f32 %v808, %v713
        %v810 = vadd.f32 %v809, %v714
        %v811 = vadd.f32 %v810, %v715
        %v812 = vadd.f32 %v811, %v716
        %v813 = vadd.f32 %v812, %v717
        %v814 = vadd.f32 %v813, %v718
        %v815 = vadd.f32 %v814, %v719
        %v816 = vadd.f32 %v815, %v720
        %v817 = vadd.f32 %v816, %v721
        %v818 = vadd.f32 %v817, %v722
        %v819 = vadd.f32 %v818, %v723
        %v820 = vadd.f32 %v819, %v724
        %v821 = vadd.f32 %v820, %v725
        %v822 = vadd.f32 %v821, %v726
        %v823 = vadd.f32 %v822, %v727
        %v824 = vadd.f32 %v823, %v728
        %v825 = vadd.f32 %v824, %v729
        %v826 = vadd.f32 %v825, %v730
        %v827 = vadd.f32 %v826, %v731
        %v828 = vadd.f32 %v827, %v732
        %v829 = vadd.f32 %v828, %v733
        %v830 = vadd.f32 %v829, %v734
        %v831 = vadd.f32 %v830, %v735
        %v832 = vadd.f32 %v831, %v736
        %v833 = vadd.f32 %v832, %v737
        %v834 = vadd.f32 %v833, %v738
        %v835 = vadd.f32 %v834, %v739
        %v836 = vadd.f32 %v835, %v740
        %v837 = vadd.f32 %v805, %v836
        %838 = vst [vmem:[#allocation3] sm:$0xff] %v837
        %v839 = vld [vmem:[#allocation4] sm:$0xff]
        %v840 = vmul.f32 %v709, %v709
        %v841 = vmul.f32 %v710, %v710
        %v842 = vmul.f32 %v711, %v711
        %v843 = vmul.f32 %v712, %v712
        %v844 = vmul.f32 %v713, %v713
        %v845 = vmul.f32 %v714, %v714
        %v846 = vmul.f32 %v715, %v715
        %v847 = vmul.f32 %v716, %v716
        %v848 = vmul.f32 %v717, %v717
        %v849 = vmul.f32 %v718, %v718
        %v850 = vmul.f32 %v719, %v719
        %v851 = vmul.f32 %v720, %v720
        %v852 = vmul.f32 %v721, %v721
        %v853 = vmul.f32 %v722, %v722
        %v854 = vmul.f32 %v723, %v723
        %v855 = vmul.f32 %v724, %v724
        %v856 = vmul.f32 %v725, %v725
        %v857 = vmul.f32 %v726, %v726
        %v858 = vmul.f32 %v727, %v727
        %v859 = vmul.f32 %v728, %v728
        %v860 = vmul.f32 %v729, %v729
        %v861 = vmul.f32 %v730, %v730
        %v862 = vmul.f32 %v731, %v731
        %v863 = vmul.f32 %v732, %v732
        %v864 = vmul.f32 %v733, %v733
        %v865 = vmul.f32 %v734, %v734
        %v866 = vmul.f32 %v735, %v735
        %v867 = vmul.f32 %v736, %v736
        %v868 = vmul.f32 %v737, %v737
        %v869 = vmul.f32 %v738, %v738
        %v870 = vmul.f32 %v739, %v739
        %v871 = vmul.f32 %v740, %v740
        %v872 = vadd.f32 %v840, %v841
        %v873 = vadd.f32 %v872, %v842
        %v874 = vadd.f32 %v873, %v843
        %v875 = vadd.f32 %v874, %v844
        %v876 = vadd.f32 %v875, %v845
        %v877 = vadd.f32 %v876, %v846
        %v878 = vadd.f32 %v877, %v847
        %v879 = vadd.f32 %v878, %v848
        %v880 = vadd.f32 %v879, %v849
        %v881 = vadd.f32 %v880, %v850
        %v882 = vadd.f32 %v881, %v851
        %v883 = vadd.f32 %v882, %v852
        %v884 = vadd.f32 %v883, %v853
        %v885 = vadd.f32 %v884, %v854
        %v886 = vadd.f32 %v885, %v855
        %v887 = vadd.f32 %v886, %v856
        %v888 = vadd.f32 %v887, %v857
        %v889 = vadd.f32 %v888, %v858
        %v890 = vadd.f32 %v889, %v859
        %v891 = vadd.f32 %v890, %v860
        %v892 = vadd.f32 %v891, %v861
        %v893 = vadd.f32 %v892, %v862
        %v894 = vadd.f32 %v893, %v863
        %v895 = vadd.f32 %v894, %v864
        %v896 = vadd.f32 %v895, %v865
        %v897 = vadd.f32 %v896, %v866
        %v898 = vadd.f32 %v897, %v867
        %v899 = vadd.f32 %v898, %v868
        %v900 = vadd.f32 %v899, %v869
        %v901 = vadd.f32 %v900, %v870
        %v902 = vadd.f32 %v901, %v871
        %v903 = vadd.f32 %v839, %v902
        %904 = vst [vmem:[#allocation4] sm:$0xff] %v903
      $region40: #{aspp_forward.2} parent=27 // pred_fallthru
        _
      // Predicated region
      $region41: #{aspp_forward.2} parent=27 // pred_check
        _
      $region42: #{aspp_forward.2} parent=27 // pred_check_branch
        %906 = sbr.rel (%p288) target = $region44
      $region43: #{aspp_forward.2} parent=27 // pred_region
        %v907 = vld [vmem:[#allocation3] sm:$0xff]
        %908 = vst [vmem:[%s281] sm:$0xff] %v907
        %v909 = vld [vmem:[#allocation4] sm:$0xff]
        %910 = vst [vmem:[%s285] sm:$0xff] %v909
      $region44: #{aspp_forward.2} parent=27 // pred_fallthru
        _
      %s911 = sadd.s32 %s21, %s22
      %s912 = smul.u32 32, %s911
      %p913 = scmp.lt.s32.totalorder %s912, 63
      %s914 = scalar_select %p913, %s912, 63
      %s915 = smul.addr %s914, 4
      %s916 = scalar_lea.vmem %s2, %s915
      %p917 = scmp.lt.s32.totalorder %s21, 1
      %s918 = scalar_select %p917, %s21, 1
      %s919 = smul.addr %s918, 8
      %s920 = scalar_lea.vmem %s3, %s919
      %p921 = scmp.lt.s32.totalorder %s21, 1
      %s922 = scalar_select %p921, %s21, 1
      %s923 = smul.addr %s922, 8
      %s924 = scalar_lea.vmem %s4, %s923
      // Predicated region
      $region45: #{aspp_forward.2} parent=27 // pred_check
        %p925 = pneg %p111
      $region46: #{aspp_forward.2} parent=27 // pred_check_branch
        %927 = sbr.rel (%p925) target = $region48
      $region47: #{aspp_forward.2} parent=27 // pred_region
        %s928 = sadd.s32 %s21, %s22
        %s929 = smul.u32 32, %s928
      $region48: #{aspp_forward.2} parent=27 // pred_fallthru
        _
      // Predicated region
      $region49: #{aspp_forward.2} parent=27 // pred_check
        %p930 = pneg %p137
      $region50: #{aspp_forward.2} parent=27 // pred_check_branch
        %932 = sbr.rel (%p930) target = $region52
      $region51: #{aspp_forward.2} parent=27 // pred_region
        _
      $region52: #{aspp_forward.2} parent=27 // pred_fallthru
        _
      // Predicated region
      $region53: #{aspp_forward.2} parent=27 // pred_check
        %p933 = pneg %p163
      $region54: #{aspp_forward.2} parent=27 // pred_check_branch
        %935 = sbr.rel (%p933) target = $region56
      $region55: #{aspp_forward.2} parent=27 // pred_region
        _
      $region56: #{aspp_forward.2} parent=27 // pred_fallthru
        _
    $region28: #{aspp_forward.2} parent=5 // pred_fallthru
      _
    %p936 = scmp.le.s32.totalorder 2, %s11
    // Predicated region
    $region57: #{aspp_forward.2} parent=5 // pred_check
      %p937 = pneg %p936
    $region58: #{aspp_forward.2} parent=5 // pred_check_branch
      %939 = sbr.rel (%p937) target = $region60
    $region59: #{aspp_forward.2} parent=5 // pred_region
      %s940 = ssub.s32 %s11, 2
      // Predicated region
      $region61: #{aspp_forward.2} parent=59 // pred_check
        %p941 = pneg %p117
      $region62: #{aspp_forward.2} parent=59 // pred_check_branch
        %943 = sbr.rel (%p941) target = $region64
      $region63: #{aspp_forward.2} parent=59 // pred_region
        %s944 = sadd.s32 %s24, %s25
        %s945 = smul.u32 32, %s944
        %p946 = scmp.lt.s32.totalorder %s945, 63
        %s947 = scalar_select %p946, %s945, 63
        %s948 = smul.addr %s947, 4
        %s949 = scalar_lea.vmem %s2, %s948
      $region64: #{aspp_forward.2} parent=59 // pred_fallthru
        _
      // Predicated region
      $region65: #{aspp_forward.2} parent=59 // pred_check
        %p950 = pneg %p143
      $region66: #{aspp_forward.2} parent=59 // pred_check_branch
        %952 = sbr.rel (%p950) target = $region68
      $region67: #{aspp_forward.2} parent=59 // pred_region
        %p953 = scmp.lt.s32.totalorder %s24, 1
        %s954 = scalar_select %p953, %s24, 1
        %s955 = smul.addr %s954, 8
        %s956 = scalar_lea.vmem %s3, %s955
      $region68: #{aspp_forward.2} parent=59 // pred_fallthru
        _
      // Predicated region
      $region69: #{aspp_forward.2} parent=59 // pred_check
        %p957 = pneg %p169
      $region70: #{aspp_forward.2} parent=59 // pred_check_branch
        %959 = sbr.rel (%p957) target = $region72
      $region71: #{aspp_forward.2} parent=59 // pred_region
        %p960 = scmp.lt.s32.totalorder %s24, 1
        %s961 = scalar_select %p960, %s24, 1
        %s962 = smul.addr %s961, 8
        %s963 = scalar_lea.vmem %s4, %s962
      $region72: #{aspp_forward.2} parent=59 // pred_fallthru
        _
    $region60: #{aspp_forward.2} parent=5 // pred_fallthru
      _
  $region6: #{aspp_forward.2} parent=0 // loop_footer
    %s15 = sadd.s32 1, %s11
  $region7: #{aspp_forward.2} parent=0 // loop_footer_branch
    %10 = sbr.rel target = $region3
  $region8: #{aspp_forward.2} parent=0 // loop_exit
    _

</llo_original>
